<compile_context>
chip_gen: v7x
topology: tpu7x:2x2x1
jax: 0.10.0
libtpu: 0.0.40
codegen_flags: <defaults>
</compile_context>

<pallas_src>
import jax
import jax.numpy as jnp
import numpy as np
from jax import lax
from jax.experimental import pallas as pl
from jax.experimental.pallas import tpu as pltpu

_EPS = 1e-5  # PyTorch LayerNorm default


def _gelu(v):
    # exact (erf-based) GELU, matching torch.nn.GELU() default
    return 0.5 * v * (1.0 + lax.erf(v / jnp.sqrt(jnp.float32(2.0))))


def mlp_mixer_kernel(patches_ref, wp_ref, bp_ref,
                     gt_ref, bt_ref, w1_ref, b1_ref, w2_ref, b2_ref,
                     gc_ref, bc_ref, w3_ref, b3_ref, w4_ref, b4_ref,
                     w5_ref, b5_ref, out_ref):
    f32 = jnp.float32
    bf16 = jnp.bfloat16
    Bt, S, K = patches_ref.shape
    c = wp_ref.shape[1]

    # Hoist all parameter loads (JAX does not CSE repeated loads / broadcasts).
    wp = wp_ref[...]
    bp = bp_ref[...]
    gt = gt_ref[...]          # (S, 1)
    bt_g = bt_ref[...]        # (S, 1)
    w1 = w1_ref[...]          # (S, c_hidden) bf16
    b1 = b1_ref[...]          # (c_hidden, 1)
    w2 = w2_ref[...]          # (c_hidden, S) bf16
    b2 = b2_ref[...]          # (S, 1)
    gc = gc_ref[...]          # (1, c)
    bc = bc_ref[...]          # (1, c)
    w3 = w3_ref[...]          # (c, s_hidden) bf16
    b3 = b3_ref[...]          # (1, s_hidden)
    w4 = w4_ref[...]          # (s_hidden, c) bf16
    b4 = b4_ref[...]          # (1, c)
    w5 = w5_ref[...]          # (S, NCp) bf16
    b5 = b5_ref[...]          # (1, NCp)

    eps = jnp.float32(_EPS)

    # ---- patch embedding (Conv2d as matmul), all Bt images folded into M ----
    patches = patches_ref[...].reshape(Bt * S, K)                       # bf16
    x = jnp.dot(patches, wp, preferred_element_type=f32) + bp           # (Bt*S, c) f32

    # ---- token mixing: LayerNorm(S) + Linear(S->c_hidden) + GELU + Linear(c_hidden->S) ----
    # No materialized transposes: LN reduces over the token axis of the (S, c)
    # tile and both matmuls contract lhs dim 0 (transposed-operand dot_general).
    rows = []
    for b in range(Bt):
        xb = x[b * S:(b + 1) * S, :]                                    # (S, c)
        mu = jnp.mean(xb, axis=0, keepdims=True)                        # (1, c)
        var = jnp.mean((xb - mu) ** 2, axis=0, keepdims=True)           # (1, c)
        xn = (xb - mu) * lax.rsqrt(var + eps) * gt + bt_g               # (S, c)
        # h[hid, ch] = sum_s w1[s, hid] * xn[s, ch]
        h = lax.dot_general(w1, xn.astype(bf16),
                            dimension_numbers=(((0,), (0,)), ((), ())),
                            preferred_element_type=f32)                 # (c_hidden, c)
        h = _gelu(h + b1)
        # d[s, ch] = sum_hid w2[hid, s] * h[hid, ch]
        d = lax.dot_general(w2, h.astype(bf16),
                            dimension_numbers=(((0,), (0,)), ((), ())),
                            preferred_element_type=f32)                 # (S, c)
        rows.append(xb + d + b2)                                        # residual
    x = jnp.concatenate(rows, axis=0)                                   # (Bt*S, c)

    # ---- channel mixing: LayerNorm(c) + Linear(c->s_hidden) + GELU + Linear(s_hidden->c) ----
    mu = jnp.mean(x, axis=1, keepdims=True)                             # (Bt*S, 1)
    var = jnp.mean((x - mu) ** 2, axis=1, keepdims=True)
    xn = (x - mu) * lax.rsqrt(var + eps) * gc + bc                      # (Bt*S, c)
    h = _gelu(jnp.dot(xn.astype(bf16), w3, preferred_element_type=f32) + b3)
    x = x + jnp.dot(h.astype(bf16), w4, preferred_element_type=f32) + b4

    # ---- classifier head: avg-pool over channels, batched Linear(S->classes), LogSoftmax ----
    pooled = jnp.mean(x.reshape(Bt, S, c), axis=2)                      # (Bt, S)
    logits = jnp.dot(pooled.astype(bf16), w5,
                     preferred_element_type=f32) + b5                   # (Bt, NCp)
    m = jnp.max(logits, axis=-1, keepdims=True)
    lse = jnp.log(jnp.sum(jnp.exp(logits - m), axis=-1, keepdims=True)) + m
    out_ref[...] = logits - lse                                         # (Bt, NCp)


_PARAM_ORDER = ['wp', 'bp', 'gt', 'bt', 'w1', 'b1', 'w2', 'b2',
                'gc', 'bc', 'w3', 'b3', 'w4', 'b4', 'w5', 'b5']


def extract_patches(x_img, p):
    B, C_in, H, W = x_img.shape
    hp, wp_ = H // p, W // p
    S, K = hp * wp_, C_in * p * p
    patches = x_img.reshape(B, C_in, hp, p, wp_, p)
    patches = patches.transpose(0, 2, 4, 1, 3, 5).reshape(B, S, K)
    return patches


def mlp_mixer_forward(x_img, params, p, *, batch_tile=8):
    f32, bf16 = jnp.float32, jnp.bfloat16
    patches = extract_patches(x_img, p)                 # (B, S, K) f32
    B, S, K = patches.shape
    num_class = params['w5'].shape[1]
    NCp = ((num_class + 127) // 128) * 128              # lane-dense output classes
    c_hidden = params['w1'].shape[1]

    bt = min(batch_tile, B)
    Bp = ((B + bt - 1) // bt) * bt
    if Bp != B:
        patches = jnp.pad(patches, ((0, Bp - B), (0, 0), (0, 0)))
    patches = patches.astype(bf16)                      # bf16 MXU operand

    # Weights -> bf16 (matmul operands); biases/gammas/betas stay f32.
    # w5/b5 padded along the class dim; padded biases = -1e9 so padded logits
    # never win the softmax max and contribute exp(.)=0 to the log-sum-exp.
    kp = {
        'wp': params['wp'].astype(bf16),
        'bp': params['bp'].reshape(1, -1).astype(f32),
        'gt': params['gt'].reshape(S, 1).astype(f32),
        'bt': params['bt'].reshape(S, 1).astype(f32),
        'w1': params['w1'].astype(bf16),
        'b1': params['b1'].reshape(c_hidden, 1).astype(f32),
        'w2': params['w2'].astype(bf16),
        'b2': params['b2'].reshape(S, 1).astype(f32),
        'gc': params['gc'].reshape(1, -1).astype(f32),
        'bc': params['bc'].reshape(1, -1).astype(f32),
        'w3': params['w3'].astype(bf16),
        'b3': params['b3'].reshape(1, -1).astype(f32),
        'w4': params['w4'].astype(bf16),
        'b4': params['b4'].reshape(1, -1).astype(f32),
        'w5': jnp.pad(params['w5'].astype(f32),
                      ((0, 0), (0, NCp - num_class))).astype(bf16),
        'b5': jnp.pad(params['b5'].reshape(1, -1).astype(f32),
                      ((0, 0), (0, NCp - num_class)), constant_values=-1e9),
    }
    plist = [kp[k] for k in _PARAM_ORDER]
    param_specs = [pl.BlockSpec(kp[k].shape, lambda i: (0, 0)) for k in _PARAM_ORDER]

    out = pl.pallas_call(
        mlp_mixer_kernel,
        out_shape=jax.ShapeDtypeStruct((Bp, NCp), f32),
        grid_spec=pltpu.PrefetchScalarGridSpec(
            num_scalar_prefetch=0,
            grid=(Bp // bt,),
            in_specs=[pl.BlockSpec((bt, S, K), lambda i: (i, 0, 0))] + param_specs,
            out_specs=pl.BlockSpec((bt, NCp), lambda i: (i, 0)),
        ),
        compiler_params=pltpu.CompilerParams(
            dimension_semantics=("parallel",),
            vmem_limit_bytes=64 * 1024 * 1024,
        ),
    )(patches, *plist)
    return out[:B, :num_class]                           # (B, num_class)


def init_params(key, c, p, c_hidden, s_hidden, h, w, num_class):
    S = (h // p) * (w // p)
    K = 3 * p * p
    ks = jax.random.split(key, 12)

    def lin(k, fan_in, shape):
        return (jax.random.normal(k, shape, jnp.float32) / jnp.sqrt(fan_in)).astype(jnp.float32)

    return dict(
        wp=lin(ks[0], K, (K, c)), bp=lin(ks[1], K, (1, c)),
        gt=jnp.ones((1, S), jnp.float32), bt=jnp.zeros((1, S), jnp.float32),
        w1=lin(ks[2], S, (S, c_hidden)), b1=lin(ks[3], S, (1, c_hidden)),
        w2=lin(ks[4], c_hidden, (c_hidden, S)), b2=lin(ks[5], c_hidden, (1, S)),
        gc=jnp.ones((1, c), jnp.float32), bc=jnp.zeros((1, c), jnp.float32),
        w3=lin(ks[6], c, (c, s_hidden)), b3=lin(ks[7], c, (1, s_hidden)),
        w4=lin(ks[8], s_hidden, (s_hidden, c)), b4=lin(ks[9], s_hidden, (1, c)),
        w5=lin(ks[10], S, (S, num_class)), b5=lin(ks[11], S, (1, num_class)),
    )


def reference_forward(x_img, params, p):
    # pure-JAX f32 replica of the PyTorch forward for validation
    patches = extract_patches(x_img, p)
    gelu = lambda v: 0.5 * v * (1.0 + lax.erf(v / jnp.sqrt(jnp.float32(2.0))))

    def ln(v, g, b):
        mu = v.mean(-1, keepdims=True)
        var = ((v - mu) ** 2).mean(-1, keepdims=True)
        return (v - mu) / jnp.sqrt(var + _EPS) * g + b

    x = patches @ params['wp'] + params['bp']                      # (B, S, c)
    xt = jnp.swapaxes(x, 1, 2)                                     # (B, c, S)
    t = ln(xt, params['gt'], params['bt'])
    t = gelu(t @ params['w1'] + params['b1'])
    t = t @ params['w2'] + params['b2']
    x = x + jnp.swapaxes(t, 1, 2)
    ch = ln(x, params['gc'], params['bc'])
    ch = gelu(ch @ params['w3'] + params['b3'])
    x = x + ch @ params['w4'] + params['b4']
    pooled = x.mean(-1)                                            # (B, S)
    logits = pooled @ params['w5'] + params['b5']                  # (B, num_class)
    return jax.nn.log_softmax(logits, axis=-1)


if __name__ == "__main__":
    B, p, c, c_hidden, s_hidden, H, W, num_class = 2, 4, 8, 32, 32, 16, 16, 10
    key = jax.random.PRNGKey(0)
    kx, kp = jax.random.split(key)
    x_img = jax.random.normal(kx, (B, 3, H, W), jnp.float32)
    params = init_params(kp, c, p, c_hidden, s_hidden, H, W, num_class)

    out = mlp_mixer_forward(x_img, params, p)
    out = jax.block_until_ready(out)

    ref = reference_forward(x_img, params, p)
    # tolerance covers bf16 matmul operands vs. the pure-f32 reference
    if not np.allclose(np.asarray(out), np.asarray(ref), rtol=1e-1, atol=1e-1):
        raise AssertionError("Pallas kernel output mismatches pure-JAX reference")
    print("KERNEL_OK")
</pallas_src>

<mosaic_0001>
module attributes {stable_mosaic.version = 11 : i64} {
  func.func @mlp_mixer_kernel(%arg0: i32, %arg1: memref<2x16x48xbf16, #tpu.memory_space<vmem>>, %arg2: memref<48x8xbf16, #tpu.memory_space<vmem>>, %arg3: memref<1x8xf32, #tpu.memory_space<vmem>>, %arg4: memref<16x1xf32, #tpu.memory_space<vmem>>, %arg5: memref<16x1xf32, #tpu.memory_space<vmem>>, %arg6: memref<16x32xbf16, #tpu.memory_space<vmem>>, %arg7: memref<32x1xf32, #tpu.memory_space<vmem>>, %arg8: memref<32x16xbf16, #tpu.memory_space<vmem>>, %arg9: memref<16x1xf32, #tpu.memory_space<vmem>>, %arg10: memref<1x8xf32, #tpu.memory_space<vmem>>, %arg11: memref<1x8xf32, #tpu.memory_space<vmem>>, %arg12: memref<8x32xbf16, #tpu.memory_space<vmem>>, %arg13: memref<1x32xf32, #tpu.memory_space<vmem>>, %arg14: memref<32x8xbf16, #tpu.memory_space<vmem>>, %arg15: memref<1x8xf32, #tpu.memory_space<vmem>>, %arg16: memref<16x128xbf16, #tpu.memory_space<vmem>>, %arg17: memref<1x128xf32, #tpu.memory_space<vmem>>, %arg18: memref<2x128xf32, #tpu.memory_space<vmem>>) attributes {dimension_semantics = [#tpu.dimension_semantics<parallel>], iteration_bounds = array<i64: 1>, scalar_prefetch = 0 : i64, scratch_operands = 0 : i64, tpu.core_type = #tpu.core_type<tc>, window_params = [{transform_indices = @transform_0, window_bounds = array<i64: 2, 16, 48>}, {pipeline_mode = #tpu.pipeline_mode<synchronous>, transform_indices = @transform_1, window_bounds = array<i64: 48, 8>}, {pipeline_mode = #tpu.pipeline_mode<synchronous>, transform_indices = @transform_2, window_bounds = array<i64: 1, 8>}, {pipeline_mode = #tpu.pipeline_mode<synchronous>, transform_indices = @transform_3, window_bounds = array<i64: 16, 1>}, {pipeline_mode = #tpu.pipeline_mode<synchronous>, transform_indices = @transform_4, window_bounds = array<i64: 16, 1>}, {pipeline_mode = #tpu.pipeline_mode<synchronous>, transform_indices = @transform_5, window_bounds = array<i64: 16, 32>}, {pipeline_mode = #tpu.pipeline_mode<synchronous>, transform_indices = @transform_6, window_bounds = array<i64: 32, 1>}, {pipeline_mode = #tpu.pipeline_mode<synchronous>, transform_indices = @transform_7, window_bounds = array<i64: 32, 16>}, {pipeline_mode = #tpu.pipeline_mode<synchronous>, transform_indices = @transform_8, window_bounds = array<i64: 16, 1>}, {pipeline_mode = #tpu.pipeline_mode<synchronous>, transform_indices = @transform_9, window_bounds = array<i64: 1, 8>}, {pipeline_mode = #tpu.pipeline_mode<synchronous>, transform_indices = @transform_10, window_bounds = array<i64: 1, 8>}, {pipeline_mode = #tpu.pipeline_mode<synchronous>, transform_indices = @transform_11, window_bounds = array<i64: 8, 32>}, {pipeline_mode = #tpu.pipeline_mode<synchronous>, transform_indices = @transform_12, window_bounds = array<i64: 1, 32>}, {pipeline_mode = #tpu.pipeline_mode<synchronous>, transform_indices = @transform_13, window_bounds = array<i64: 32, 8>}, {pipeline_mode = #tpu.pipeline_mode<synchronous>, transform_indices = @transform_14, window_bounds = array<i64: 1, 8>}, {pipeline_mode = #tpu.pipeline_mode<synchronous>, transform_indices = @transform_15, window_bounds = array<i64: 16, 128>}, {pipeline_mode = #tpu.pipeline_mode<synchronous>, transform_indices = @transform_16, window_bounds = array<i64: 1, 128>}, {transform_indices = @transform_17, window_bounds = array<i64: 2, 128>}]} {
    %c0 = arith.constant 0 : index
    %c0_0 = arith.constant 0 : index
    %0 = vector.load %arg2[%c0, %c0_0] : memref<48x8xbf16, #tpu.memory_space<vmem>>, vector<48x8xbf16>
    %c0_1 = arith.constant 0 : index
    %c0_2 = arith.constant 0 : index
    %1 = vector.load %arg3[%c0_1, %c0_2] : memref<1x8xf32, #tpu.memory_space<vmem>>, vector<1x8xf32>
    %c0_3 = arith.constant 0 : index
    %c0_4 = arith.constant 0 : index
    %2 = vector.load %arg4[%c0_3, %c0_4] : memref<16x1xf32, #tpu.memory_space<vmem>>, vector<16x1xf32>
    %c0_5 = arith.constant 0 : index
    %c0_6 = arith.constant 0 : index
    %3 = vector.load %arg5[%c0_5, %c0_6] : memref<16x1xf32, #tpu.memory_space<vmem>>, vector<16x1xf32>
    %c0_7 = arith.constant 0 : index
    %c0_8 = arith.constant 0 : index
    %4 = vector.load %arg6[%c0_7, %c0_8] : memref<16x32xbf16, #tpu.memory_space<vmem>>, vector<16x32xbf16>
    %c0_9 = arith.constant 0 : index
    %c0_10 = arith.constant 0 : index
    %5 = vector.load %arg7[%c0_9, %c0_10] : memref<32x1xf32, #tpu.memory_space<vmem>>, vector<32x1xf32>
    %c0_11 = arith.constant 0 : index
    %c0_12 = arith.constant 0 : index
    %6 = vector.load %arg8[%c0_11, %c0_12] : memref<32x16xbf16, #tpu.memory_space<vmem>>, vector<32x16xbf16>
    %c0_13 = arith.constant 0 : index
    %c0_14 = arith.constant 0 : index
    %7 = vector.load %arg9[%c0_13, %c0_14] : memref<16x1xf32, #tpu.memory_space<vmem>>, vector<16x1xf32>
    %c0_15 = arith.constant 0 : index
    %c0_16 = arith.constant 0 : index
    %8 = vector.load %arg10[%c0_15, %c0_16] : memref<1x8xf32, #tpu.memory_space<vmem>>, vector<1x8xf32>
    %c0_17 = arith.constant 0 : index
    %c0_18 = arith.constant 0 : index
    %9 = vector.load %arg11[%c0_17, %c0_18] : memref<1x8xf32, #tpu.memory_space<vmem>>, vector<1x8xf32>
    %c0_19 = arith.constant 0 : index
    %c0_20 = arith.constant 0 : index
    %10 = vector.load %arg12[%c0_19, %c0_20] : memref<8x32xbf16, #tpu.memory_space<vmem>>, vector<8x32xbf16>
    %c0_21 = arith.constant 0 : index
    %c0_22 = arith.constant 0 : index
    %11 = vector.load %arg13[%c0_21, %c0_22] : memref<1x32xf32, #tpu.memory_space<vmem>>, vector<1x32xf32>
    %c0_23 = arith.constant 0 : index
    %c0_24 = arith.constant 0 : index
    %12 = vector.load %arg14[%c0_23, %c0_24] : memref<32x8xbf16, #tpu.memory_space<vmem>>, vector<32x8xbf16>
    %c0_25 = arith.constant 0 : index
    %c0_26 = arith.constant 0 : index
    %13 = vector.load %arg15[%c0_25, %c0_26] : memref<1x8xf32, #tpu.memory_space<vmem>>, vector<1x8xf32>
    %c0_27 = arith.constant 0 : index
    %c0_28 = arith.constant 0 : index
    %14 = vector.load %arg16[%c0_27, %c0_28] : memref<16x128xbf16, #tpu.memory_space<vmem>>, vector<16x128xbf16>
    %c0_29 = arith.constant 0 : index
    %c0_30 = arith.constant 0 : index
    %15 = vector.load %arg17[%c0_29, %c0_30] : memref<1x128xf32, #tpu.memory_space<vmem>>, vector<1x128xf32>
    %c0_31 = arith.constant 0 : index
    %c0_32 = arith.constant 0 : index
    %c0_33 = arith.constant 0 : index
    %16 = vector.load %arg1[%c0_31, %c0_32, %c0_33] : memref<2x16x48xbf16, #tpu.memory_space<vmem>>, vector<2x16x48xbf16>
    %17 = vector.shape_cast %16 : vector<2x16x48xbf16> to vector<32x48xbf16>
    %cst = arith.constant dense<0.000000e+00> : vector<32x8xf32>
    %18 = tpu.matmul %17, %0, %cst {dimension_numbers = #tpu.dot_dimension_numbers<[1], [0], [0], [1], [0, 0, 1, 1], [], []>} : vector<32x48xbf16>, vector<48x8xbf16>, vector<32x8xf32> -> vector<32x8xf32>
    %19 = vector.broadcast %1 : vector<1x8xf32> to vector<32x8xf32>
    %20 = arith.addf %18, %19 : vector<32x8xf32>
    %21 = vector.extract_strided_slice %20 {offsets = [0, 0], sizes = [16, 8], strides = [1, 1]} : vector<32x8xf32> to vector<16x8xf32>
    %cst_34 = arith.constant dense<0.000000e+00> : vector<8xf32>
    %22 = vector.multi_reduction <add>, %21, %cst_34 [0] : vector<16x8xf32> to vector<8xf32>
    %23 = vector.shape_cast %22 : vector<8xf32> to vector<1x8xf32>
    %cst_35 = arith.constant 1.600000e+01 : f32
    %24 = vector.broadcast %cst_35 : f32 to vector<1x8xf32>
    %25 = arith.divf %23, %24 : vector<1x8xf32>
    %26 = vector.broadcast %25 : vector<1x8xf32> to vector<16x8xf32>
    %27 = arith.subf %21, %26 : vector<16x8xf32>
    %28 = arith.mulf %27, %27 : vector<16x8xf32>
    %cst_36 = arith.constant dense<0.000000e+00> : vector<8xf32>
    %29 = vector.multi_reduction <add>, %28, %cst_36 [0] : vector<16x8xf32> to vector<8xf32>
    %30 = vector.shape_cast %29 : vector<8xf32> to vector<1x8xf32>
    %cst_37 = arith.constant 1.600000e+01 : f32
    %31 = vector.broadcast %cst_37 : f32 to vector<1x8xf32>
    %32 = arith.divf %30, %31 : vector<1x8xf32>
    %33 = vector.broadcast %25 : vector<1x8xf32> to vector<16x8xf32>
    %34 = arith.subf %21, %33 : vector<16x8xf32>
    %cst_38 = arith.constant 9.99999974E-6 : f32
    %35 = vector.broadcast %cst_38 : f32 to vector<1x8xf32>
    %36 = arith.addf %32, %35 : vector<1x8xf32>
    %37 = math.rsqrt %36 : vector<1x8xf32>
    %38 = vector.broadcast %37 : vector<1x8xf32> to vector<16x8xf32>
    %39 = arith.mulf %34, %38 : vector<16x8xf32>
    %40 = vector.broadcast %2 : vector<16x1xf32> to vector<16x8xf32>
    %41 = arith.mulf %39, %40 : vector<16x8xf32>
    %42 = vector.broadcast %3 : vector<16x1xf32> to vector<16x8xf32>
    %43 = arith.addf %41, %42 : vector<16x8xf32>
    %44 = arith.truncf %43 : vector<16x8xf32> to vector<16x8xbf16>
    %cst_39 = arith.constant dense<0.000000e+00> : vector<32x8xf32>
    %45 = tpu.matmul %4, %44, %cst_39 {dimension_numbers = #tpu.dot_dimension_numbers<[0], [0], [1], [1], [0, 1, 1, 1], [], []>} : vector<16x32xbf16>, vector<16x8xbf16>, vector<32x8xf32> -> vector<32x8xf32>
    %46 = vector.broadcast %5 : vector<32x1xf32> to vector<32x8xf32>
    %47 = arith.addf %45, %46 : vector<32x8xf32>
    %cst_40 = arith.constant 5.000000e-01 : f32
    %48 = vector.broadcast %cst_40 : f32 to vector<32x8xf32>
    %49 = arith.mulf %48, %47 : vector<32x8xf32>
    %cst_41 = arith.constant 2.000000e+00 : f32
    %50 = math.sqrt %cst_41 : f32
    %51 = vector.broadcast %50 : f32 to vector<32x8xf32>
    %52 = arith.divf %47, %51 : vector<32x8xf32>
    %53 = math.erf %52 : vector<32x8xf32>
    %cst_42 = arith.constant 1.000000e+00 : f32
    %54 = vector.broadcast %cst_42 : f32 to vector<32x8xf32>
    %55 = arith.addf %54, %53 : vector<32x8xf32>
    %56 = arith.mulf %49, %55 : vector<32x8xf32>
    %57 = arith.truncf %56 : vector<32x8xf32> to vector<32x8xbf16>
    %cst_43 = arith.constant dense<0.000000e+00> : vector<16x8xf32>
    %58 = tpu.matmul %6, %57, %cst_43 {dimension_numbers = #tpu.dot_dimension_numbers<[0], [0], [1], [1], [0, 1, 1, 1], [], []>} : vector<32x16xbf16>, vector<32x8xbf16>, vector<16x8xf32> -> vector<16x8xf32>
    %59 = arith.addf %21, %58 : vector<16x8xf32>
    %60 = vector.broadcast %7 : vector<16x1xf32> to vector<16x8xf32>
    %61 = arith.addf %59, %60 : vector<16x8xf32>
    %62 = vector.extract_strided_slice %20 {offsets = [16, 0], sizes = [16, 8], strides = [1, 1]} : vector<32x8xf32> to vector<16x8xf32>
    %cst_44 = arith.constant dense<0.000000e+00> : vector<8xf32>
    %63 = vector.multi_reduction <add>, %62, %cst_44 [0] : vector<16x8xf32> to vector<8xf32>
    %64 = vector.shape_cast %63 : vector<8xf32> to vector<1x8xf32>
    %cst_45 = arith.constant 1.600000e+01 : f32
    %65 = vector.broadcast %cst_45 : f32 to vector<1x8xf32>
    %66 = arith.divf %64, %65 : vector<1x8xf32>
    %67 = vector.broadcast %66 : vector<1x8xf32> to vector<16x8xf32>
    %68 = arith.subf %62, %67 : vector<16x8xf32>
    %69 = arith.mulf %68, %68 : vector<16x8xf32>
    %cst_46 = arith.constant dense<0.000000e+00> : vector<8xf32>
    %70 = vector.multi_reduction <add>, %69, %cst_46 [0] : vector<16x8xf32> to vector<8xf32>
    %71 = vector.shape_cast %70 : vector<8xf32> to vector<1x8xf32>
    %cst_47 = arith.constant 1.600000e+01 : f32
    %72 = vector.broadcast %cst_47 : f32 to vector<1x8xf32>
    %73 = arith.divf %71, %72 : vector<1x8xf32>
    %74 = vector.broadcast %66 : vector<1x8xf32> to vector<16x8xf32>
    %75 = arith.subf %62, %74 : vector<16x8xf32>
    %cst_48 = arith.constant 9.99999974E-6 : f32
    %76 = vector.broadcast %cst_48 : f32 to vector<1x8xf32>
    %77 = arith.addf %73, %76 : vector<1x8xf32>
    %78 = math.rsqrt %77 : vector<1x8xf32>
    %79 = vector.broadcast %78 : vector<1x8xf32> to vector<16x8xf32>
    %80 = arith.mulf %75, %79 : vector<16x8xf32>
    %81 = vector.broadcast %2 : vector<16x1xf32> to vector<16x8xf32>
    %82 = arith.mulf %80, %81 : vector<16x8xf32>
    %83 = vector.broadcast %3 : vector<16x1xf32> to vector<16x8xf32>
    %84 = arith.addf %82, %83 : vector<16x8xf32>
    %85 = arith.truncf %84 : vector<16x8xf32> to vector<16x8xbf16>
    %cst_49 = arith.constant dense<0.000000e+00> : vector<32x8xf32>
    %86 = tpu.matmul %4, %85, %cst_49 {dimension_numbers = #tpu.dot_dimension_numbers<[0], [0], [1], [1], [0, 1, 1, 1], [], []>} : vector<16x32xbf16>, vector<16x8xbf16>, vector<32x8xf32> -> vector<32x8xf32>
    %87 = vector.broadcast %5 : vector<32x1xf32> to vector<32x8xf32>
    %88 = arith.addf %86, %87 : vector<32x8xf32>
    %cst_50 = arith.constant 5.000000e-01 : f32
    %89 = vector.broadcast %cst_50 : f32 to vector<32x8xf32>
    %90 = arith.mulf %89, %88 : vector<32x8xf32>
    %cst_51 = arith.constant 2.000000e+00 : f32
    %91 = math.sqrt %cst_51 : f32
    %92 = vector.broadcast %91 : f32 to vector<32x8xf32>
    %93 = arith.divf %88, %92 : vector<32x8xf32>
    %94 = math.erf %93 : vector<32x8xf32>
    %cst_52 = arith.constant 1.000000e+00 : f32
    %95 = vector.broadcast %cst_52 : f32 to vector<32x8xf32>
    %96 = arith.addf %95, %94 : vector<32x8xf32>
    %97 = arith.mulf %90, %96 : vector<32x8xf32>
    %98 = arith.truncf %97 : vector<32x8xf32> to vector<32x8xbf16>
    %cst_53 = arith.constant dense<0.000000e+00> : vector<16x8xf32>
    %99 = tpu.matmul %6, %98, %cst_53 {dimension_numbers = #tpu.dot_dimension_numbers<[0], [0], [1], [1], [0, 1, 1, 1], [], []>} : vector<32x16xbf16>, vector<32x8xbf16>, vector<16x8xf32> -> vector<16x8xf32>
    %100 = arith.addf %62, %99 : vector<16x8xf32>
    %101 = vector.broadcast %7 : vector<16x1xf32> to vector<16x8xf32>
    %102 = arith.addf %100, %101 : vector<16x8xf32>
    %103 = tpu.concatenate %61, %102 in 0 : vector<16x8xf32>, vector<16x8xf32> -> vector<32x8xf32>
    %cst_54 = arith.constant dense<0.000000e+00> : vector<32xf32>
    %104 = vector.multi_reduction <add>, %103, %cst_54 [1] : vector<32x8xf32> to vector<32xf32>
    %105 = vector.shape_cast %104 : vector<32xf32> to vector<32x1xf32>
    %cst_55 = arith.constant 8.000000e+00 : f32
    %106 = vector.broadcast %cst_55 : f32 to vector<32x1xf32>
    %107 = arith.divf %105, %106 : vector<32x1xf32>
    %108 = vector.broadcast %107 : vector<32x1xf32> to vector<32x8xf32>
    %109 = arith.subf %103, %108 : vector<32x8xf32>
    %110 = arith.mulf %109, %109 : vector<32x8xf32>
    %cst_56 = arith.constant dense<0.000000e+00> : vector<32xf32>
    %111 = vector.multi_reduction <add>, %110, %cst_56 [1] : vector<32x8xf32> to vector<32xf32>
    %112 = vector.shape_cast %111 : vector<32xf32> to vector<32x1xf32>
    %cst_57 = arith.constant 8.000000e+00 : f32
    %113 = vector.broadcast %cst_57 : f32 to vector<32x1xf32>
    %114 = arith.divf %112, %113 : vector<32x1xf32>
    %115 = vector.broadcast %107 : vector<32x1xf32> to vector<32x8xf32>
    %116 = arith.subf %103, %115 : vector<32x8xf32>
    %cst_58 = arith.constant 9.99999974E-6 : f32
    %117 = vector.broadcast %cst_58 : f32 to vector<32x1xf32>
    %118 = arith.addf %114, %117 : vector<32x1xf32>
    %119 = math.rsqrt %118 : vector<32x1xf32>
    %120 = vector.broadcast %119 : vector<32x1xf32> to vector<32x8xf32>
    %121 = arith.mulf %116, %120 : vector<32x8xf32>
    %122 = vector.broadcast %8 : vector<1x8xf32> to vector<32x8xf32>
    %123 = arith.mulf %121, %122 : vector<32x8xf32>
    %124 = vector.broadcast %9 : vector<1x8xf32> to vector<32x8xf32>
    %125 = arith.addf %123, %124 : vector<32x8xf32>
    %126 = arith.truncf %125 : vector<32x8xf32> to vector<32x8xbf16>
    %cst_59 = arith.constant dense<0.000000e+00> : vector<32x32xf32>
    %127 = tpu.matmul %126, %10, %cst_59 {dimension_numbers = #tpu.dot_dimension_numbers<[1], [0], [0], [1], [0, 0, 1, 1], [], []>} : vector<32x8xbf16>, vector<8x32xbf16>, vector<32x32xf32> -> vector<32x32xf32>
    %128 = vector.broadcast %11 : vector<1x32xf32> to vector<32x32xf32>
    %129 = arith.addf %127, %128 : vector<32x32xf32>
    %cst_60 = arith.constant 5.000000e-01 : f32
    %130 = vector.broadcast %cst_60 : f32 to vector<32x32xf32>
    %131 = arith.mulf %130, %129 : vector<32x32xf32>
    %cst_61 = arith.constant 2.000000e+00 : f32
    %132 = math.sqrt %cst_61 : f32
    %133 = vector.broadcast %132 : f32 to vector<32x32xf32>
    %134 = arith.divf %129, %133 : vector<32x32xf32>
    %135 = math.erf %134 : vector<32x32xf32>
    %cst_62 = arith.constant 1.000000e+00 : f32
    %136 = vector.broadcast %cst_62 : f32 to vector<32x32xf32>
    %137 = arith.addf %136, %135 : vector<32x32xf32>
    %138 = arith.mulf %131, %137 : vector<32x32xf32>
    %139 = arith.truncf %138 : vector<32x32xf32> to vector<32x32xbf16>
    %cst_63 = arith.constant dense<0.000000e+00> : vector<32x8xf32>
    %140 = tpu.matmul %139, %12, %cst_63 {dimension_numbers = #tpu.dot_dimension_numbers<[1], [0], [0], [1], [0, 0, 1, 1], [], []>} : vector<32x32xbf16>, vector<32x8xbf16>, vector<32x8xf32> -> vector<32x8xf32>
    %141 = arith.addf %103, %140 : vector<32x8xf32>
    %142 = vector.broadcast %13 : vector<1x8xf32> to vector<32x8xf32>
    %143 = arith.addf %141, %142 : vector<32x8xf32>
    %144 = vector.shape_cast %143 : vector<32x8xf32> to vector<2x16x8xf32>
    %cst_64 = arith.constant dense<0.000000e+00> : vector<2x16xf32>
    %145 = vector.multi_reduction <add>, %144, %cst_64 [2] : vector<2x16x8xf32> to vector<2x16xf32>
    %cst_65 = arith.constant 8.000000e+00 : f32
    %146 = vector.broadcast %cst_65 : f32 to vector<2x16xf32>
    %147 = arith.divf %145, %146 : vector<2x16xf32>
    %148 = arith.truncf %147 : vector<2x16xf32> to vector<2x16xbf16>
    %cst_66 = arith.constant dense<0.000000e+00> : vector<2x128xf32>
    %149 = tpu.matmul %148, %14, %cst_66 {dimension_numbers = #tpu.dot_dimension_numbers<[1], [0], [0], [1], [0, 0, 1, 1], [], []>} : vector<2x16xbf16>, vector<16x128xbf16>, vector<2x128xf32> -> vector<2x128xf32>
    %150 = vector.broadcast %15 : vector<1x128xf32> to vector<2x128xf32>
    %151 = arith.addf %149, %150 : vector<2x128xf32>
    %cst_67 = arith.constant dense<0xFF800000> : vector<2xf32>
    %152 = vector.multi_reduction <maximumf>, %151, %cst_67 [1] : vector<2x128xf32> to vector<2xf32>
    %153 = vector.shape_cast %152 : vector<2xf32> to vector<2x1xf32>
    %154 = vector.broadcast %153 : vector<2x1xf32> to vector<2x128xf32>
    %155 = arith.subf %151, %154 : vector<2x128xf32>
    %156 = math.exp %155 : vector<2x128xf32>
    %cst_68 = arith.constant dense<0.000000e+00> : vector<2xf32>
    %157 = vector.multi_reduction <add>, %156, %cst_68 [1] : vector<2x128xf32> to vector<2xf32>
    %158 = vector.shape_cast %157 : vector<2xf32> to vector<2x1xf32>
    %159 = math.log %158 : vector<2x1xf32>
    %160 = arith.addf %159, %153 : vector<2x1xf32>
    %161 = vector.broadcast %160 : vector<2x1xf32> to vector<2x128xf32>
    %162 = arith.subf %151, %161 : vector<2x128xf32>
    %c0_69 = arith.constant 0 : index
    %c0_70 = arith.constant 0 : index
    %163 = vector.load %arg18[%c0_69, %c0_70] : memref<2x128xf32, #tpu.memory_space<vmem>>, vector<2x128xf32>
    tpu.vector_store %arg18[%c0_69, %c0_70], %162 {strides = array<i32>} : memref<2x128xf32, #tpu.memory_space<vmem>>, vector<2x128xf32>,
    return
  }
  func.func @transform_0(%arg0: i32) -> (i32, i32, i32) {
    %c0_i32 = arith.constant 0 : i32
    %c0_i32_0 = arith.constant 0 : i32
    %c0_i32_1 = arith.constant 0 : i32
    return %arg0, %c0_i32, %c0_i32_0 : i32, i32, i32
  }
  func.func @transform_1(%arg0: i32) -> (i32, i32) {
    %c0_i32 = arith.constant 0 : i32
    %c0_i32_0 = arith.constant 0 : i32
    %c0_i32_1 = arith.constant 0 : i32
    return %c0_i32, %c0_i32_0 : i32, i32
  }
  func.func @transform_2(%arg0: i32) -> (i32, i32) {
    %c0_i32 = arith.constant 0 : i32
    %c0_i32_0 = arith.constant 0 : i32
    %c0_i32_1 = arith.constant 0 : i32
    return %c0_i32, %c0_i32_0 : i32, i32
  }
  func.func @transform_3(%arg0: i32) -> (i32, i32) {
    %c0_i32 = arith.constant 0 : i32
    %c0_i32_0 = arith.constant 0 : i32
    %c0_i32_1 = arith.constant 0 : i32
    return %c0_i32, %c0_i32_0 : i32, i32
  }
  func.func @transform_4(%arg0: i32) -> (i32, i32) {
    %c0_i32 = arith.constant 0 : i32
    %c0_i32_0 = arith.constant 0 : i32
    %c0_i32_1 = arith.constant 0 : i32
    return %c0_i32, %c0_i32_0 : i32, i32
  }
  func.func @transform_5(%arg0: i32) -> (i32, i32) {
    %c0_i32 = arith.constant 0 : i32
    %c0_i32_0 = arith.constant 0 : i32
    %c0_i32_1 = arith.constant 0 : i32
    return %c0_i32, %c0_i32_0 : i32, i32
  }
  func.func @transform_6(%arg0: i32) -> (i32, i32) {
    %c0_i32 = arith.constant 0 : i32
    %c0_i32_0 = arith.constant 0 : i32
    %c0_i32_1 = arith.constant 0 : i32
    return %c0_i32, %c0_i32_0 : i32, i32
  }
  func.func @transform_7(%arg0: i32) -> (i32, i32) {
    %c0_i32 = arith.constant 0 : i32
    %c0_i32_0 = arith.constant 0 : i32
    %c0_i32_1 = arith.constant 0 : i32
    return %c0_i32, %c0_i32_0 : i32, i32
  }
  func.func @transform_8(%arg0: i32) -> (i32, i32) {
    %c0_i32 = arith.constant 0 : i32
    %c0_i32_0 = arith.constant 0 : i32
    %c0_i32_1 = arith.constant 0 : i32
    return %c0_i32, %c0_i32_0 : i32, i32
  }
  func.func @transform_9(%arg0: i32) -> (i32, i32) {
    %c0_i32 = arith.constant 0 : i32
    %c0_i32_0 = arith.constant 0 : i32
    %c0_i32_1 = arith.constant 0 : i32
    return %c0_i32, %c0_i32_0 : i32, i32
  }
  func.func @transform_10(%arg0: i32) -> (i32, i32) {
    %c0_i32 = arith.constant 0 : i32
    %c0_i32_0 = arith.constant 0 : i32
    %c0_i32_1 = arith.constant 0 : i32
    return %c0_i32, %c0_i32_0 : i32, i32
  }
  func.func @transform_11(%arg0: i32) -> (i32, i32) {
    %c0_i32 = arith.constant 0 : i32
    %c0_i32_0 = arith.constant 0 : i32
    %c0_i32_1 = arith.constant 0 : i32
    return %c0_i32, %c0_i32_0 : i32, i32
  }
  func.func @transform_12(%arg0: i32) -> (i32, i32) {
    %c0_i32 = arith.constant 0 : i32
    %c0_i32_0 = arith.constant 0 : i32
    %c0_i32_1 = arith.constant 0 : i32
    return %c0_i32, %c0_i32_0 : i32, i32
  }
  func.func @transform_13(%arg0: i32) -> (i32, i32) {
    %c0_i32 = arith.constant 0 : i32
    %c0_i32_0 = arith.constant 0 : i32
    %c0_i32_1 = arith.constant 0 : i32
    return %c0_i32, %c0_i32_0 : i32, i32
  }
  func.func @transform_14(%arg0: i32) -> (i32, i32) {
    %c0_i32 = arith.constant 0 : i32
    %c0_i32_0 = arith.constant 0 : i32
    %c0_i32_1 = arith.constant 0 : i32
    return %c0_i32, %c0_i32_0 : i32, i32
  }
  func.func @transform_15(%arg0: i32) -> (i32, i32) {
    %c0_i32 = arith.constant 0 : i32
    %c0_i32_0 = arith.constant 0 : i32
    %c0_i32_1 = arith.constant 0 : i32
    return %c0_i32, %c0_i32_0 : i32, i32
  }
  func.func @transform_16(%arg0: i32) -> (i32, i32) {
    %c0_i32 = arith.constant 0 : i32
    %c0_i32_0 = arith.constant 0 : i32
    %c0_i32_1 = arith.constant 0 : i32
    return %c0_i32, %c0_i32_0 : i32, i32
  }
  func.func @transform_17(%arg0: i32) -> (i32, i32) {
    %c0_i32 = arith.constant 0 : i32
    %c0_i32_0 = arith.constant 0 : i32
    return %arg0, %c0_i32 : i32, i32
  }
}

</mosaic_0001>

<llo_original>
// kernel: tpu_custom_call.1
$region0: #{tpu_custom_call.1}
  #allocation0 [shape = 'u32[]', space=smem, size = 0x4, offset = 0x4, fixed_abs, tag = 'smem constant byte address 0x4 - core index']
  #allocation1 [shape = 'u32[144,128]{1,0:T(1,128)}', space=vmem, size = 0x12000, scoped, tag = 'internal scratch']
  %s0 = inlined_call_operand.hbm [shape: bf16[2,16,48], index: 0, kind: input, shape index: {}]
  %s1 = inlined_call_operand.hbm [shape: bf16[48,8], index: 1, kind: input, shape index: {}]
  %s2 = inlined_call_operand.hbm [shape: f32[1,8], index: 2, kind: input, shape index: {}]
  %s3 = inlined_call_operand.hbm [shape: f32[16,1], index: 3, kind: input, shape index: {}]
  %s4 = inlined_call_operand.hbm [shape: f32[16,1], index: 4, kind: input, shape index: {}]
  %s5 = inlined_call_operand.hbm [shape: bf16[16,32], index: 5, kind: input, shape index: {}]
  %s6 = inlined_call_operand.hbm [shape: f32[32,1], index: 6, kind: input, shape index: {}]
  %s7 = inlined_call_operand.hbm [shape: bf16[32,16], index: 7, kind: input, shape index: {}]
  %s8 = inlined_call_operand.hbm [shape: f32[16,1], index: 8, kind: input, shape index: {}]
  %s9 = inlined_call_operand.hbm [shape: f32[1,8], index: 9, kind: input, shape index: {}]
  %s10 = inlined_call_operand.hbm [shape: f32[1,8], index: 10, kind: input, shape index: {}]
  %s11 = inlined_call_operand.hbm [shape: bf16[8,32], index: 11, kind: input, shape index: {}]
  %s12 = inlined_call_operand.hbm [shape: f32[1,32], index: 12, kind: input, shape index: {}]
  %s13 = inlined_call_operand.hbm [shape: bf16[32,8], index: 13, kind: input, shape index: {}]
  %s14 = inlined_call_operand.hbm [shape: f32[1,8], index: 14, kind: input, shape index: {}]
  %s15 = inlined_call_operand.hbm [shape: bf16[16,128], index: 15, kind: input, shape index: {}]
  %s16 = inlined_call_operand.hbm [shape: f32[1,128], index: 16, kind: input, shape index: {}]
  %s17 = inlined_call_operand.hbm [shape: f32[2,128], index: 17, kind: output, shape index: {}]
  %s18 = sld [smem:[#allocation0]]
  $region146: #{tpu_custom_call.1} parent=0
    _
  %s20 = ssub.s32 1, %s18
  %s21 = scalar_select 0, %s20, %s18
  $region1: #{tpu_custom_call.1} parent=0
    #allocation2 [shape = 'u8[8192]{0}', space=vmem, size = 0x2000, scoped, tag = 'input window, operand 0, single buffered']
    #allocation3 [shape = 's32[1]{0}', space=sflag, size = 0x4, scoped, tag = 'scoped memory for tpu_custom_call.1']
    #allocation4 [shape = 's32[1]{0}', space=sflag, size = 0x4, scoped, tag = 'scoped memory for tpu_custom_call.1']
    #allocation5 [shape = 'u8[12288]{0}', space=vmem, size = 0x3000, scoped, tag = 'input window, operand 1, single buffered']
    #allocation6 [shape = 's32[1]{0}', space=sflag, size = 0x4, scoped, tag = 'scoped memory for tpu_custom_call.1']
    #allocation7 [shape = 'u8[512]{0}', space=vmem, size = 0x400, scoped, tag = 'input window, operand 2, single buffered']
    #allocation8 [shape = 'u8[8192]{0}', space=vmem, size = 0x2000, scoped, tag = 'input window, operand 3, single buffered']
    #allocation9 [shape = 's32[1]{0}', space=sflag, size = 0x4, scoped, tag = 'scoped memory for tpu_custom_call.1']
    #allocation10 [shape = 'u8[8192]{0}', space=vmem, size = 0x2000, scoped, tag = 'input window, operand 4, single buffered']
    #allocation11 [shape = 'u8[4096]{0}', space=vmem, size = 0x1000, scoped, tag = 'input window, operand 5, single buffered']
    #allocation12 [shape = 's32[1]{0}', space=sflag, size = 0x4, scoped, tag = 'scoped memory for tpu_custom_call.1']
    #allocation13 [shape = 'u8[16384]{0}', space=vmem, size = 0x4000, scoped, tag = 'input window, operand 6, single buffered']
    #allocation14 [shape = 'u8[8192]{0}', space=vmem, size = 0x2000, scoped, tag = 'input window, operand 7, single buffered']
    #allocation15 [shape = 's32[1]{0}', space=sflag, size = 0x4, scoped, tag = 'scoped memory for tpu_custom_call.1']
    #allocation16 [shape = 'u8[8192]{0}', space=vmem, size = 0x2000, scoped, tag = 'input window, operand 8, single buffered']
    #allocation17 [shape = 'u8[512]{0}', space=vmem, size = 0x400, scoped, tag = 'input window, operand 9, single buffered']
    #allocation18 [shape = 's32[1]{0}', space=sflag, size = 0x4, scoped, tag = 'scoped memory for tpu_custom_call.1']
    #allocation19 [shape = 'u8[512]{0}', space=vmem, size = 0x400, scoped, tag = 'input window, operand 10, single buffered']
    #allocation20 [shape = 'u8[2048]{0}', space=vmem, size = 0x800, scoped, tag = 'input window, operand 11, single buffered']
    #allocation21 [shape = 's32[1]{0}', space=sflag, size = 0x4, scoped, tag = 'scoped memory for tpu_custom_call.1']
    #allocation22 [shape = 'u8[512]{0}', space=vmem, size = 0x400, scoped, tag = 'input window, operand 12, single buffered']
    #allocation23 [shape = 'u8[8192]{0}', space=vmem, size = 0x2000, scoped, tag = 'input window, operand 13, single buffered']
    #allocation24 [shape = 's32[1]{0}', space=sflag, size = 0x4, scoped, tag = 'scoped memory for tpu_custom_call.1']
    #allocation25 [shape = 'u8[512]{0}', space=vmem, size = 0x400, scoped, tag = 'input window, operand 14, single buffered']
    #allocation26 [shape = 'u8[4096]{0}', space=vmem, size = 0x1000, scoped, tag = 'input window, operand 15, single buffered']
    #allocation27 [shape = 's32[1]{0}', space=sflag, size = 0x4, scoped, tag = 'scoped memory for tpu_custom_call.1']
    #allocation28 [shape = 'u8[512]{0}', space=vmem, size = 0x400, scoped, tag = 'input window, operand 16, single buffered']
    #allocation29 [shape = 'u8[1024]{0}', space=vmem, size = 0x400, scoped, tag = 'output window, operand 0, single buffered']
    %22 = vsyncpa [#allocation3], 0
    %23 = vsyncpa [#allocation6], 0
    %24 = vsyncpa [#allocation9], 0
    %25 = vsyncpa [#allocation12], 0
    %26 = vsyncpa [#allocation15], 0
    %27 = vsyncpa [#allocation18], 0
    %28 = vsyncpa [#allocation21], 0
    %29 = vsyncpa [#allocation24], 0
    %30 = vsyncpa [#allocation27], 0
    %31 = vsyncpa [#allocation4], 0
    // Predicated region
    $region2: #{tpu_custom_call.1} parent=1 // pred_check
      _
    $region3: #{tpu_custom_call.1} parent=1 // pred_check_branch
      %33 = sbr.rel (0) target = $region5
    $region4: #{tpu_custom_call.1} parent=1 // pred_region
      %s35 = ssub.s32 256, 256
      %36 = vsyncadd [#allocation3], %s35
      %s37 = sshll.u32 [#allocation2], 4
      %s38 = int_to_ptr.vmem [resolvable:$true] %s37
      %43 = dma.hbm_to_vmem [thread:$0]  %s0, 256, %s38, [#allocation3], 64, 64, 4
    $region5: #{tpu_custom_call.1} parent=1 // pred_fallthru
      _
    // Predicated region
    $region6: #{tpu_custom_call.1} parent=1 // pred_check
      _
    $region7: #{tpu_custom_call.1} parent=1 // pred_check_branch
      %45 = sbr.rel (0) target = $region9
    $region8: #{tpu_custom_call.1} parent=1 // pred_region
      %s47 = ssub.s32 384, 384
      %48 = vsyncadd [#allocation6], %s47
      %s49 = sshll.u32 [#allocation5], 4
      %s50 = int_to_ptr.vmem [resolvable:$true] %s49
      %55 = dma.hbm_to_vmem [thread:$0]  %s1, 384, %s50, [#allocation6], 64, 64, 4
    $region9: #{tpu_custom_call.1} parent=1 // pred_fallthru
      _
    // Predicated region
    $region10: #{tpu_custom_call.1} parent=1 // pred_check
      _
    $region11: #{tpu_custom_call.1} parent=1 // pred_check_branch
      %57 = sbr.rel (0) target = $region13
    $region12: #{tpu_custom_call.1} parent=1 // pred_region
      %s59 = ssub.s32 16, 16
      %60 = vsyncadd [#allocation6], %s59
      %s62 = sshll.u32 [#allocation7], 4
      %s63 = int_to_ptr.vmem [resolvable:$true] %s62
      %65 = dma.hbm_to_vmem [thread:$0]  %s2, 16, %s63, [#allocation6]
    $region13: #{tpu_custom_call.1} parent=1 // pred_fallthru
      _
    // Predicated region
    $region14: #{tpu_custom_call.1} parent=1 // pred_check
      _
    $region15: #{tpu_custom_call.1} parent=1 // pred_check_branch
      %67 = sbr.rel (0) target = $region17
    $region16: #{tpu_custom_call.1} parent=1 // pred_region
      %s69 = ssub.s32 256, 256
      %70 = vsyncadd [#allocation9], %s69
      %s71 = sshll.u32 [#allocation8], 4
      %s72 = int_to_ptr.vmem [resolvable:$true] %s71
      %77 = dma.hbm_to_vmem [thread:$0]  %s3, 256, %s72, [#allocation9], 128, 128, 8
    $region17: #{tpu_custom_call.1} parent=1 // pred_fallthru
      _
    // Predicated region
    $region18: #{tpu_custom_call.1} parent=1 // pred_check
      _
    $region19: #{tpu_custom_call.1} parent=1 // pred_check_branch
      %79 = sbr.rel (0) target = $region21
    $region20: #{tpu_custom_call.1} parent=1 // pred_region
      %s81 = ssub.s32 256, 256
      %82 = vsyncadd [#allocation9], %s81
      %s83 = sshll.u32 [#allocation10], 4
      %s84 = int_to_ptr.vmem [resolvable:$true] %s83
      %89 = dma.hbm_to_vmem [thread:$0]  %s4, 256, %s84, [#allocation9], 128, 128, 8
    $region21: #{tpu_custom_call.1} parent=1 // pred_fallthru
      _
    // Predicated region
    $region22: #{tpu_custom_call.1} parent=1 // pred_check
      _
    $region23: #{tpu_custom_call.1} parent=1 // pred_check_branch
      %91 = sbr.rel (0) target = $region25
    $region24: #{tpu_custom_call.1} parent=1 // pred_region
      %s93 = ssub.s32 128, 128
      %94 = vsyncadd [#allocation12], %s93
      %s95 = sshll.u32 [#allocation11], 4
      %s96 = int_to_ptr.vmem [resolvable:$true] %s95
      %101 = dma.hbm_to_vmem [thread:$0]  %s5, 128, %s96, [#allocation12], 64, 64, 4
    $region25: #{tpu_custom_call.1} parent=1 // pred_fallthru
      _
    // Predicated region
    $region26: #{tpu_custom_call.1} parent=1 // pred_check
      _
    $region27: #{tpu_custom_call.1} parent=1 // pred_check_branch
      %103 = sbr.rel (0) target = $region29
    $region28: #{tpu_custom_call.1} parent=1 // pred_region
      %s105 = ssub.s32 512, 512
      %106 = vsyncadd [#allocation12], %s105
      %s107 = sshll.u32 [#allocation13], 4
      %s108 = int_to_ptr.vmem [resolvable:$true] %s107
      %113 = dma.hbm_to_vmem [thread:$0]  %s6, 512, %s108, [#allocation12], 128, 128, 8
    $region29: #{tpu_custom_call.1} parent=1 // pred_fallthru
      _
    // Predicated region
    $region30: #{tpu_custom_call.1} parent=1 // pred_check
      _
    $region31: #{tpu_custom_call.1} parent=1 // pred_check_branch
      %115 = sbr.rel (0) target = $region33
    $region32: #{tpu_custom_call.1} parent=1 // pred_region
      %s117 = ssub.s32 256, 256
      %118 = vsyncadd [#allocation15], %s117
      %s119 = sshll.u32 [#allocation14], 4
      %s120 = int_to_ptr.vmem [resolvable:$true] %s119
      %125 = dma.hbm_to_vmem [thread:$0]  %s7, 256, %s120, [#allocation15], 64, 64, 4
    $region33: #{tpu_custom_call.1} parent=1 // pred_fallthru
      _
    // Predicated region
    $region34: #{tpu_custom_call.1} parent=1 // pred_check
      _
    $region35: #{tpu_custom_call.1} parent=1 // pred_check_branch
      %127 = sbr.rel (0) target = $region37
    $region36: #{tpu_custom_call.1} parent=1 // pred_region
      %s129 = ssub.s32 256, 256
      %130 = vsyncadd [#allocation15], %s129
      %s131 = sshll.u32 [#allocation16], 4
      %s132 = int_to_ptr.vmem [resolvable:$true] %s131
      %137 = dma.hbm_to_vmem [thread:$0]  %s8, 256, %s132, [#allocation15], 128, 128, 8
    $region37: #{tpu_custom_call.1} parent=1 // pred_fallthru
      _
    // Predicated region
    $region38: #{tpu_custom_call.1} parent=1 // pred_check
      _
    $region39: #{tpu_custom_call.1} parent=1 // pred_check_branch
      %139 = sbr.rel (0) target = $region41
    $region40: #{tpu_custom_call.1} parent=1 // pred_region
      %s141 = ssub.s32 16, 16
      %142 = vsyncadd [#allocation18], %s141
      %s144 = sshll.u32 [#allocation17], 4
      %s145 = int_to_ptr.vmem [resolvable:$true] %s144
      %147 = dma.hbm_to_vmem [thread:$0]  %s9, 16, %s145, [#allocation18]
    $region41: #{tpu_custom_call.1} parent=1 // pred_fallthru
      _
    // Predicated region
    $region42: #{tpu_custom_call.1} parent=1 // pred_check
      _
    $region43: #{tpu_custom_call.1} parent=1 // pred_check_branch
      %149 = sbr.rel (0) target = $region45
    $region44: #{tpu_custom_call.1} parent=1 // pred_region
      %s151 = ssub.s32 16, 16
      %152 = vsyncadd [#allocation18], %s151
      %s154 = sshll.u32 [#allocation19], 4
      %s155 = int_to_ptr.vmem [resolvable:$true] %s154
      %157 = dma.hbm_to_vmem [thread:$0]  %s10, 16, %s155, [#allocation18]
    $region45: #{tpu_custom_call.1} parent=1 // pred_fallthru
      _
    // Predicated region
    $region46: #{tpu_custom_call.1} parent=1 // pred_check
      _
    $region47: #{tpu_custom_call.1} parent=1 // pred_check_branch
      %159 = sbr.rel (0) target = $region49
    $region48: #{tpu_custom_call.1} parent=1 // pred_region
      %s161 = ssub.s32 64, 64
      %162 = vsyncadd [#allocation21], %s161
      %s164 = sshll.u32 [#allocation20], 4
      %s165 = int_to_ptr.vmem [resolvable:$true] %s164
      %167 = dma.hbm_to_vmem [thread:$0]  %s11, 64, %s165, [#allocation21]
    $region49: #{tpu_custom_call.1} parent=1 // pred_fallthru
      _
    // Predicated region
    $region50: #{tpu_custom_call.1} parent=1 // pred_check
      _
    $region51: #{tpu_custom_call.1} parent=1 // pred_check_branch
      %169 = sbr.rel (0) target = $region53
    $region52: #{tpu_custom_call.1} parent=1 // pred_region
      %s171 = ssub.s32 16, 16
      %172 = vsyncadd [#allocation21], %s171
      %s174 = sshll.u32 [#allocation22], 4
      %s175 = int_to_ptr.vmem [resolvable:$true] %s174
      %177 = dma.hbm_to_vmem [thread:$0]  %s12, 16, %s175, [#allocation21]
    $region53: #{tpu_custom_call.1} parent=1 // pred_fallthru
      _
    // Predicated region
    $region54: #{tpu_custom_call.1} parent=1 // pred_check
      _
    $region55: #{tpu_custom_call.1} parent=1 // pred_check_branch
      %179 = sbr.rel (0) target = $region57
    $region56: #{tpu_custom_call.1} parent=1 // pred_region
      %s181 = ssub.s32 256, 256
      %182 = vsyncadd [#allocation24], %s181
      %s183 = sshll.u32 [#allocation23], 4
      %s184 = int_to_ptr.vmem [resolvable:$true] %s183
      %189 = dma.hbm_to_vmem [thread:$0]  %s13, 256, %s184, [#allocation24], 64, 64, 4
    $region57: #{tpu_custom_call.1} parent=1 // pred_fallthru
      _
    // Predicated region
    $region58: #{tpu_custom_call.1} parent=1 // pred_check
      _
    $region59: #{tpu_custom_call.1} parent=1 // pred_check_branch
      %191 = sbr.rel (0) target = $region61
    $region60: #{tpu_custom_call.1} parent=1 // pred_region
      %s193 = ssub.s32 16, 16
      %194 = vsyncadd [#allocation24], %s193
      %s196 = sshll.u32 [#allocation25], 4
      %s197 = int_to_ptr.vmem [resolvable:$true] %s196
      %199 = dma.hbm_to_vmem [thread:$0]  %s14, 16, %s197, [#allocation24]
    $region61: #{tpu_custom_call.1} parent=1 // pred_fallthru
      _
    // Predicated region
    $region62: #{tpu_custom_call.1} parent=1 // pred_check
      _
    $region63: #{tpu_custom_call.1} parent=1 // pred_check_branch
      %201 = sbr.rel (0) target = $region65
    $region64: #{tpu_custom_call.1} parent=1 // pred_region
      %s203 = ssub.s32 128, 128
      %204 = vsyncadd [#allocation27], %s203
      %s205 = sshll.u32 [#allocation26], 4
      %s206 = int_to_ptr.vmem [resolvable:$true] %s205
      %211 = dma.hbm_to_vmem [thread:$0]  %s15, 128, %s206, [#allocation27], 64, 64, 4
    $region65: #{tpu_custom_call.1} parent=1 // pred_fallthru
      _
    // Predicated region
    $region66: #{tpu_custom_call.1} parent=1 // pred_check
      _
    $region67: #{tpu_custom_call.1} parent=1 // pred_check_branch
      %213 = sbr.rel (0) target = $region69
    $region68: #{tpu_custom_call.1} parent=1 // pred_region
      %s215 = ssub.s32 16, 16
      %216 = vsyncadd [#allocation27], %s215
      %s218 = sshll.u32 [#allocation28], 4
      %s219 = int_to_ptr.vmem [resolvable:$true] %s218
      %221 = dma.hbm_to_vmem [thread:$0]  %s16, 16, %s219, [#allocation27]
    $region69: #{tpu_custom_call.1} parent=1 // pred_fallthru
      _
    // Predicated region
    $region70: #{tpu_custom_call.1} parent=1 // pred_check
      _
    $region71: #{tpu_custom_call.1} parent=1 // pred_check_branch
      %223 = sbr.rel (0) target = $region73
    $region72: #{tpu_custom_call.1} parent=1 // pred_region
      %224 = dma.done [#allocation3], 256
    $region73: #{tpu_custom_call.1} parent=1 // pred_fallthru
      _
    // Predicated region
    $region74: #{tpu_custom_call.1} parent=1 // pred_check
      _
    $region75: #{tpu_custom_call.1} parent=1 // pred_check_branch
      %226 = sbr.rel (0) target = $region77
    $region76: #{tpu_custom_call.1} parent=1 // pred_region
      %227 = dma.done [#allocation6], 384
    $region77: #{tpu_custom_call.1} parent=1 // pred_fallthru
      _
    // Predicated region
    $region78: #{tpu_custom_call.1} parent=1 // pred_check
      _
    $region79: #{tpu_custom_call.1} parent=1 // pred_check_branch
      %229 = sbr.rel (0) target = $region81
    $region80: #{tpu_custom_call.1} parent=1 // pred_region
      %230 = dma.done [#allocation6], 16
    $region81: #{tpu_custom_call.1} parent=1 // pred_fallthru
      _
    // Predicated region
    $region82: #{tpu_custom_call.1} parent=1 // pred_check
      _
    $region83: #{tpu_custom_call.1} parent=1 // pred_check_branch
      %232 = sbr.rel (0) target = $region85
    $region84: #{tpu_custom_call.1} parent=1 // pred_region
      %233 = dma.done [#allocation9], 256
    $region85: #{tpu_custom_call.1} parent=1 // pred_fallthru
      _
    // Predicated region
    $region86: #{tpu_custom_call.1} parent=1 // pred_check
      _
    $region87: #{tpu_custom_call.1} parent=1 // pred_check_branch
      %235 = sbr.rel (0) target = $region89
    $region88: #{tpu_custom_call.1} parent=1 // pred_region
      %236 = dma.done [#allocation9], 256
    $region89: #{tpu_custom_call.1} parent=1 // pred_fallthru
      _
    // Predicated region
    $region90: #{tpu_custom_call.1} parent=1 // pred_check
      _
    $region91: #{tpu_custom_call.1} parent=1 // pred_check_branch
      %238 = sbr.rel (0) target = $region93
    $region92: #{tpu_custom_call.1} parent=1 // pred_region
      %239 = dma.done [#allocation12], 128
    $region93: #{tpu_custom_call.1} parent=1 // pred_fallthru
      _
    // Predicated region
    $region94: #{tpu_custom_call.1} parent=1 // pred_check
      _
    $region95: #{tpu_custom_call.1} parent=1 // pred_check_branch
      %241 = sbr.rel (0) target = $region97
    $region96: #{tpu_custom_call.1} parent=1 // pred_region
      %242 = dma.done [#allocation12], 512
    $region97: #{tpu_custom_call.1} parent=1 // pred_fallthru
      _
    // Predicated region
    $region98: #{tpu_custom_call.1} parent=1 // pred_check
      _
    $region99: #{tpu_custom_call.1} parent=1 // pred_check_branch
      %244 = sbr.rel (0) target = $region101
    $region100: #{tpu_custom_call.1} parent=1 // pred_region
      %245 = dma.done [#allocation15], 256
    $region101: #{tpu_custom_call.1} parent=1 // pred_fallthru
      _
    // Predicated region
    $region102: #{tpu_custom_call.1} parent=1 // pred_check
      _
    $region103: #{tpu_custom_call.1} parent=1 // pred_check_branch
      %247 = sbr.rel (0) target = $region105
    $region104: #{tpu_custom_call.1} parent=1 // pred_region
      %248 = dma.done [#allocation15], 256
    $region105: #{tpu_custom_call.1} parent=1 // pred_fallthru
      _
    // Predicated region
    $region106: #{tpu_custom_call.1} parent=1 // pred_check
      _
    $region107: #{tpu_custom_call.1} parent=1 // pred_check_branch
      %250 = sbr.rel (0) target = $region109
    $region108: #{tpu_custom_call.1} parent=1 // pred_region
      %251 = dma.done [#allocation18], 16
    $region109: #{tpu_custom_call.1} parent=1 // pred_fallthru
      _
    // Predicated region
    $region110: #{tpu_custom_call.1} parent=1 // pred_check
      _
    $region111: #{tpu_custom_call.1} parent=1 // pred_check_branch
      %253 = sbr.rel (0) target = $region113
    $region112: #{tpu_custom_call.1} parent=1 // pred_region
      %254 = dma.done [#allocation18], 16
    $region113: #{tpu_custom_call.1} parent=1 // pred_fallthru
      _
    // Predicated region
    $region114: #{tpu_custom_call.1} parent=1 // pred_check
      _
    $region115: #{tpu_custom_call.1} parent=1 // pred_check_branch
      %256 = sbr.rel (0) target = $region117
    $region116: #{tpu_custom_call.1} parent=1 // pred_region
      %257 = dma.done [#allocation21], 64
    $region117: #{tpu_custom_call.1} parent=1 // pred_fallthru
      _
    // Predicated region
    $region118: #{tpu_custom_call.1} parent=1 // pred_check
      _
    $region119: #{tpu_custom_call.1} parent=1 // pred_check_branch
      %259 = sbr.rel (0) target = $region121
    $region120: #{tpu_custom_call.1} parent=1 // pred_region
      %260 = dma.done [#allocation21], 16
    $region121: #{tpu_custom_call.1} parent=1 // pred_fallthru
      _
    // Predicated region
    $region122: #{tpu_custom_call.1} parent=1 // pred_check
      _
    $region123: #{tpu_custom_call.1} parent=1 // pred_check_branch
      %262 = sbr.rel (0) target = $region125
    $region124: #{tpu_custom_call.1} parent=1 // pred_region
      %263 = dma.done [#allocation24], 256
    $region125: #{tpu_custom_call.1} parent=1 // pred_fallthru
      _
    // Predicated region
    $region126: #{tpu_custom_call.1} parent=1 // pred_check
      _
    $region127: #{tpu_custom_call.1} parent=1 // pred_check_branch
      %265 = sbr.rel (0) target = $region129
    $region128: #{tpu_custom_call.1} parent=1 // pred_region
      %266 = dma.done [#allocation24], 16
    $region129: #{tpu_custom_call.1} parent=1 // pred_fallthru
      _
    // Predicated region
    $region130: #{tpu_custom_call.1} parent=1 // pred_check
      _
    $region131: #{tpu_custom_call.1} parent=1 // pred_check_branch
      %268 = sbr.rel (0) target = $region133
    $region132: #{tpu_custom_call.1} parent=1 // pred_region
      %269 = dma.done [#allocation27], 128
    $region133: #{tpu_custom_call.1} parent=1 // pred_fallthru
      _
    // Predicated region
    $region134: #{tpu_custom_call.1} parent=1 // pred_check
      _
    $region135: #{tpu_custom_call.1} parent=1 // pred_check_branch
      %271 = sbr.rel (0) target = $region137
    $region136: #{tpu_custom_call.1} parent=1 // pred_region
      %272 = dma.done [#allocation27], 16
    $region137: #{tpu_custom_call.1} parent=1 // pred_fallthru
      _
    %v274 = vld [vmem:[#allocation5] sm:$0xf]
    %v275 = vld [vmem:[#allocation5 + $0x4] sm:$0xf]
    %v276 = vld [vmem:[#allocation5 + $0x8] sm:$0xf]
    %v277 = vld [vmem:[#allocation5 + $0xc] sm:$0xf]
    %v278 = vld [vmem:[#allocation5 + $0x10] sm:$0xf]
    %v279 = vld [vmem:[#allocation5 + $0x14] sm:$0xf]
    %v280 = vld [vmem:[#allocation7] sm:$0x1]
    %v281 = vld [vmem:[#allocation8] sm:$0xff]
    %v282 = vld [vmem:[#allocation8 + $0x8] sm:$0xff]
    %v283 = vld [vmem:[#allocation10] sm:$0xff]
    %v284 = vld [vmem:[#allocation10 + $0x8] sm:$0xff]
    %v285 = vld [vmem:[#allocation11] sm:$0xf]
    %v286 = vld [vmem:[#allocation11 + $0x4] sm:$0xf]
    %v287 = vld [vmem:[#allocation13] sm:$0xff]
    %v288 = vld [vmem:[#allocation13 + $0x8] sm:$0xff]
    %v289 = vld [vmem:[#allocation13 + $0x10] sm:$0xff]
    %v290 = vld [vmem:[#allocation13 + $0x18] sm:$0xff]
    %v291 = vld [vmem:[#allocation14] sm:$0xf]
    %v292 = vld [vmem:[#allocation14 + $0x4] sm:$0xf]
    %v293 = vld [vmem:[#allocation14 + $0x8] sm:$0xf]
    %v294 = vld [vmem:[#allocation14 + $0xc] sm:$0xf]
    %v295 = vld [vmem:[#allocation16] sm:$0xff]
    %v296 = vld [vmem:[#allocation16 + $0x8] sm:$0xff]
    %v297 = vld [vmem:[#allocation17] sm:$0x1]
    %v298 = vld [vmem:[#allocation19] sm:$0x1]
    %v299 = vld [vmem:[#allocation20] sm:$0xf]
    %v300 = vld [vmem:[#allocation22] sm:$0x1]
    %v301 = vld [vmem:[#allocation23] sm:$0xf]
    %v302 = vld [vmem:[#allocation23 + $0x4] sm:$0xf]
    %v303 = vld [vmem:[#allocation23 + $0x8] sm:$0xf]
    %v304 = vld [vmem:[#allocation23 + $0xc] sm:$0xf]
    %v305 = vld [vmem:[#allocation25] sm:$0x1]
    %v306 = vld [vmem:[#allocation26] sm:$0xf]
    %v307 = vld [vmem:[#allocation26 + $0x4] sm:$0xf]
    %v308 = vld [vmem:[#allocation28] sm:$0x1]
    %v309 = vld [vmem:[#allocation2] sm:$0xf]
    %v310 = vld [vmem:[#allocation2 + $0x4] sm:$0xf]
    %v311 = vld [vmem:[#allocation2 + $0x8] sm:$0xf]
    %v312 = vld [vmem:[#allocation2 + $0xc] sm:$0xf]
    %v314 = vlaneseq
    %v315 = vshrl.u32 %v314, 7
    %v316 = vsub.s32 0, %v315
    %v317 = vrot.slane %v280, %v316
    %v323 = vunpack.c.l.b16 %v309
    %v324 = vunpack.c.l.b16 %v310
    %v325 = vunpack.c.l.b16 %v311
    %v326 = vunpack.c.l.b16 %v312
    %v327 = vpack.c.b16 %v324, %v323
    %v328 = vpack.c.b16 %v326, %v325
    %v335 = vunpack.c.l.b16 %v274
    %v336 = vunpack.c.l.b16 %v275
    %v337 = vunpack.c.l.b16 %v276
    %v338 = vunpack.c.l.b16 %v277
    %v339 = vunpack.c.l.b16 %v278
    %v340 = vunpack.c.l.b16 %v279
    %v341 = vpack.c.b16 %v336, %v335
    %v342 = vpack.c.b16 %v338, %v337
    %v343 = vpack.c.b16 %v340, %v339
    %vm347 = vcmask 392192
    %v349 = vsel %vm347, %v327, 0
    %v352 = vsel %vm347, %v328, 0
    %354 = vmatprep.subr.bf16.mxu0 0
    %355 = vmatpush1.bf16.msra.mxu0 %v341
    %356 = vmatprep.subr.bf16.mxu0 0
    %357 = vmatpush1.bf16.msra.mxu0 %v342
    %358 = vmatprep.subr.bf16.mxu0 0
    %359 = vmatpush1.bf16.msra.mxu0 %v343
    %360 = vmatprep.subr.bf16.mxu0 0
    %361 = vmatpush1.bf16.msra.mxu0 0
    %362 = vmatprep.subr.bf16.mxu0 0
    %363 = vmatpush1.bf16.msra.mxu0 0
    %364 = vmatprep.subr.bf16.mxu0 0
    %365 = vmatpush1.bf16.msra.mxu0 0
    %366 = vmatprep.subr.bf16.mxu0 0
    %367 = vmatpush1.bf16.msra.mxu0 0
    %368 = vmatprep.subr.bf16.mxu0 0
    %369 = vmatpush1.bf16.msra.mxu0 0
    %370 = vmatprep.subr.bf16.mxu0 0
    %371 = vmatpush1.bf16.msra.mxu0 0
    %372 = vmatprep.subr.bf16.mxu0 0
    %373 = vmatpush1.bf16.msra.mxu0 0
    %374 = vmatprep.subr.bf16.mxu0 0
    %375 = vmatpush1.bf16.msra.mxu0 0
    %376 = vmatprep.subr.bf16.mxu0 0
    %377 = vmatpush1.bf16.msra.mxu0 0
    %378 = vmatprep.subr.bf16.mxu0 0
    %379 = vmatpush1.bf16.msra.mxu0 0
    %380 = vmatprep.subr.bf16.mxu0 0
    %381 = vmatpush1.bf16.msra.mxu0 0
    %382 = vmatprep.subr.bf16.mxu0 0
    %383 = vmatpush1.bf16.msra.mxu0 0
    %384 = vmatprep.subr.bf16.mxu0 0
    %385 = vmatpush1.bf16.msra.mxu0 0
    %386 = vmatprep.mubr.bf16.mxu0 0
    %387 = vmatmul.mubr.bf16.gmra.mrb[0].mxu0 %v349
    %v388 = vpop.f32.mrb[0].mxu0
    %v389 = vadd.f32 %v317, %v388
    %v390 = vpop.f32.mrb[0].mxu0
    %v391 = vpop.f32.mrb[0].mxu0
    %v392 = vadd.f32 %v317, %v391
    %v393 = vpop.f32.mrb[0].mxu0
    %394 = vmatprep.mubr.bf16.mxu0 0
    %395 = vmatmul.mubr.bf16.gmra.mrb[0].mxu0 %v352
    %v396 = vpop.f32.mrb[0].mxu0
    %v397 = vadd.f32 %v317, %v396
    %v398 = vpop.f32.mrb[0].mxu0
    %v399 = vpop.f32.mrb[0].mxu0
    %v400 = vadd.f32 %v317, %v399
    %v401 = vpop.f32.mrb[0].mxu0
    %402 = vdwg.mxu0
    %vm403 = vcmask 64512
    %v404 = vsel %vm403, %v389, 0.0
    %v405 = vsel %vm403, %v392, 0.0
    %v406 = vadd.f32 %v404, %v405
    %v407 = vrot.slane %v406, 4
    %v408 = vadd.f32 %v406, %v407
    %v409 = vrot.slane %v408, 2
    %v410 = vadd.f32 %v408, %v409
    %v411 = vrot.slane %v410, 1
    %v412 = vadd.f32 %v410, %v411
    %v413 = vrcp.pop 16.0
    %v414 = vmul.f32 %v412, %v413
    %v415 = vsub.f32 %v389, %v414
    %v416 = vsub.f32 %v392, %v414
    %v417 = vmul.f32 %v415, %v415
    %v418 = vmul.f32 %v416, %v416
    %v419 = vsel %vm403, %v417, 0.0
    %v420 = vsel %vm403, %v418, 0.0
    %v421 = vadd.f32 %v419, %v420
    %v422 = vrot.slane %v421, 4
    %v423 = vadd.f32 %v421, %v422
    %v424 = vrot.slane %v423, 2
    %v425 = vadd.f32 %v423, %v424
    %v426 = vrot.slane %v425, 1
    %v427 = vadd.f32 %v425, %v426
    %v428 = vmul.f32 %v427, %v413
    %v429 = vadd.f32 %v428, 1e-05
    %v430 = vrsqrt.pop %v429
    %v431 = vmul.f32 %v415, %v430
    %v432 = vmul.f32 %v416, %v430
    %434 = vset.pattern.permute.xlu0 0
    %435 = vperm.xlu0 %434, %v281
    %v436 = vpop.permute.xlu0 %435
    %439 = vset.pattern.permute.xlu0 0
    %440 = vperm.xlu0 %439, %v282
    %v441 = vpop.permute.xlu0 %440
    %v443 = vmul.f32 %v431, %v436
    %v444 = vmul.f32 %v432, %v441
    %446 = vset.pattern.permute.xlu0 0
    %447 = vperm.xlu0 %446, %v283
    %v448 = vpop.permute.xlu0 %447
    %451 = vset.pattern.permute.xlu0 0
    %452 = vperm.xlu0 %451, %v284
    %v453 = vpop.permute.xlu0 %452
    %v455 = vadd.f32 %v443, %v448
    %v456 = vadd.f32 %v444, %v453
    %v457 = vpack.c.bf16 %v456, %v455
    %459 = vset.pattern.permute.xlu0 0
    %460 = vperm.xlu0 %459, %v287
    %v461 = vpop.permute.xlu0 %460
    %464 = vset.pattern.permute.xlu0 0
    %465 = vperm.xlu0 %464, %v288
    %v466 = vpop.permute.xlu0 %465
    %469 = vset.pattern.permute.xlu0 0
    %470 = vperm.xlu0 %469, %v289
    %v471 = vpop.permute.xlu0 %470
    %474 = vset.pattern.permute.xlu0 0
    %475 = vperm.xlu0 %474, %v290
    %v476 = vpop.permute.xlu0 %475
    %v480 = vunpack.c.l.b16 %v285
    %v481 = vunpack.c.l.b16 %v286
    %v482 = vpack.c.b16 %v481, %v480
    %484 = vxpose.xlu0.c.b16.start [1/8] %v482, 128
    %485 = vxpose.xlu0.c.b16.cont [2/8] 0, 128
    %486 = vxpose.xlu0.c.b16.cont [3/8] 0, 128
    %487 = vxpose.xlu0.c.b16.cont [4/8] 0, 128
    %488 = vxpose.xlu0.c.b16.cont [5/8] 0, 128
    %489 = vxpose.xlu0.c.b16.cont [6/8] 0, 128
    %490 = vxpose.xlu0.c.b16.cont [7/8] 0, 128
    %491 = vxpose.xlu0.c.b16.end [8/8] 0, 128
    %v492 = vpop.trf.xlu0
    %v493 = vpop.trf.xlu0
    %v494 = vpop.trf.xlu0
    %v495 = vpop.trf.xlu0
    %v496 = vpop.trf.xlu0
    %v497 = vpop.trf.xlu0
    %v498 = vpop.trf.xlu0
    %v499 = vpop.trf.xlu0
    %vm500 = vcmask 130048
    %v502 = vsel %vm500, %v492, 0
    %v505 = vsel %vm500, %v493, 0
    %507 = vmatprep.subr.bf16.mxu0 0
    %508 = vmatpush1.bf16.msra.mxu0 %v457
    %509 = vmatprep.subr.bf16.mxu0 0
    %510 = vmatpush1.bf16.msra.mxu0 0
    %511 = vmatprep.subr.bf16.mxu0 0
    %512 = vmatpush1.bf16.msra.mxu0 0
    %513 = vmatprep.subr.bf16.mxu0 0
    %514 = vmatpush1.bf16.msra.mxu0 0
    %515 = vmatprep.subr.bf16.mxu0 0
    %516 = vmatpush1.bf16.msra.mxu0 0
    %517 = vmatprep.subr.bf16.mxu0 0
    %518 = vmatpush1.bf16.msra.mxu0 0
    %519 = vmatprep.subr.bf16.mxu0 0
    %520 = vmatpush1.bf16.msra.mxu0 0
    %521 = vmatprep.subr.bf16.mxu0 0
    %522 = vmatpush1.bf16.msra.mxu0 0
    %523 = vmatprep.subr.bf16.mxu0 0
    %524 = vmatpush1.bf16.msra.mxu0 0
    %525 = vmatprep.subr.bf16.mxu0 0
    %526 = vmatpush1.bf16.msra.mxu0 0
    %527 = vmatprep.subr.bf16.mxu0 0
    %528 = vmatpush1.bf16.msra.mxu0 0
    %529 = vmatprep.subr.bf16.mxu0 0
    %530 = vmatpush1.bf16.msra.mxu0 0
    %531 = vmatprep.subr.bf16.mxu0 0
    %532 = vmatpush1.bf16.msra.mxu0 0
    %533 = vmatprep.subr.bf16.mxu0 0
    %534 = vmatpush1.bf16.msra.mxu0 0
    %535 = vmatprep.subr.bf16.mxu0 0
    %536 = vmatpush1.bf16.msra.mxu0 0
    %537 = vmatprep.subr.bf16.mxu0 0
    %538 = vmatpush1.bf16.msra.mxu0 0
    %539 = vmatprep.mubr.bf16.mxu0 0
    %540 = vmatmul.mubr.bf16.gmra.mrb[0].mxu0 %v502
    %v541 = vpop.f32.mrb[0].mxu0
    %v542 = vadd.f32 %v461, %v541
    %v543 = vpop.f32.mrb[0].mxu0
    %v544 = vpop.f32.mrb[0].mxu0
    %v545 = vadd.f32 %v466, %v544
    %v546 = vpop.f32.mrb[0].mxu0
    %547 = vmatprep.mubr.bf16.mxu0 0
    %548 = vmatmul.mubr.bf16.gmra.mrb[0].mxu0 %v505
    %v549 = vpop.f32.mrb[0].mxu0
    %v550 = vadd.f32 %v471, %v549
    %v551 = vpop.f32.mrb[0].mxu0
    %v552 = vpop.f32.mrb[0].mxu0
    %v553 = vadd.f32 %v476, %v552
    %v554 = vpop.f32.mrb[0].mxu0
    %555 = vdwg.mxu0
    %v556 = vmul.f32 %v542, 0.5
    %v557 = vmul.f32 %v545, 0.5
    %v558 = vmul.f32 %v550, 0.5
    %v559 = vmul.f32 %v553, 0.5
    %v560 = vrcp.pop 1.4142135
    %v561 = vmul.f32 %v542, %v560
    %v562 = vmul.f32 %v545, %v560
    %v563 = vmul.f32 %v550, %v560
    %v564 = vmul.f32 %v553, %v560
    %v565 = verf.f32.pop %v561
    %v566 = verf.f32.pop %v562
    %v567 = verf.f32.pop %v563
    %v568 = verf.f32.pop %v564
    %v569 = vadd.f32 %v565, 1.0
    %v570 = vadd.f32 %v566, 1.0
    %v571 = vadd.f32 %v567, 1.0
    %v572 = vadd.f32 %v568, 1.0
    %v573 = vmul.f32 %v556, %v569
    %v574 = vmul.f32 %v557, %v570
    %v575 = vmul.f32 %v558, %v571
    %v576 = vmul.f32 %v559, %v572
    %v577 = vpack.c.bf16 %v574, %v573
    %v578 = vpack.c.bf16 %v576, %v575
    %v583 = vunpack.c.l.b16 %v291
    %v584 = vunpack.c.l.b16 %v292
    %v585 = vunpack.c.l.b16 %v293
    %v586 = vunpack.c.l.b16 %v294
    %v587 = vpack.c.b16 %v584, %v583
    %v588 = vpack.c.b16 %v586, %v585
    %591 = vxpose.xlu0.c.b16.start [1/8] %v587, 128
    %592 = vxpose.xlu0.c.b16.cont [2/8] %v588, 128
    %593 = vxpose.xlu0.c.b16.cont [3/8] 0, 128
    %594 = vxpose.xlu0.c.b16.cont [4/8] 0, 128
    %595 = vxpose.xlu0.c.b16.cont [5/8] 0, 128
    %596 = vxpose.xlu0.c.b16.cont [6/8] 0, 128
    %597 = vxpose.xlu0.c.b16.cont [7/8] 0, 128
    %598 = vxpose.xlu0.c.b16.end [8/8] 0, 128
    %v599 = vpop.trf.xlu0
    %v600 = vpop.trf.xlu0
    %v601 = vpop.trf.xlu0
    %v602 = vpop.trf.xlu0
    %v603 = vpop.trf.xlu0
    %v604 = vpop.trf.xlu0
    %v605 = vpop.trf.xlu0
    %v606 = vpop.trf.xlu0
    %vm607 = vcmask 261120
    %v609 = vsel %vm607, %v599, 0
    %611 = vmatprep.subr.bf16.mxu0 0
    %612 = vmatpush1.bf16.msra.mxu0 %v577
    %613 = vmatprep.subr.bf16.mxu0 0
    %614 = vmatpush1.bf16.msra.mxu0 %v578
    %615 = vmatprep.subr.bf16.mxu0 0
    %616 = vmatpush1.bf16.msra.mxu0 0
    %617 = vmatprep.subr.bf16.mxu0 0
    %618 = vmatpush1.bf16.msra.mxu0 0
    %619 = vmatprep.subr.bf16.mxu0 0
    %620 = vmatpush1.bf16.msra.mxu0 0
    %621 = vmatprep.subr.bf16.mxu0 0
    %622 = vmatpush1.bf16.msra.mxu0 0
    %623 = vmatprep.subr.bf16.mxu0 0
    %624 = vmatpush1.bf16.msra.mxu0 0
    %625 = vmatprep.subr.bf16.mxu0 0
    %626 = vmatpush1.bf16.msra.mxu0 0
    %627 = vmatprep.subr.bf16.mxu0 0
    %628 = vmatpush1.bf16.msra.mxu0 0
    %629 = vmatprep.subr.bf16.mxu0 0
    %630 = vmatpush1.bf16.msra.mxu0 0
    %631 = vmatprep.subr.bf16.mxu0 0
    %632 = vmatpush1.bf16.msra.mxu0 0
    %633 = vmatprep.subr.bf16.mxu0 0
    %634 = vmatpush1.bf16.msra.mxu0 0
    %635 = vmatprep.subr.bf16.mxu0 0
    %636 = vmatpush1.bf16.msra.mxu0 0
    %637 = vmatprep.subr.bf16.mxu0 0
    %638 = vmatpush1.bf16.msra.mxu0 0
    %639 = vmatprep.subr.bf16.mxu0 0
    %640 = vmatpush1.bf16.msra.mxu0 0
    %641 = vmatprep.subr.bf16.mxu0 0
    %642 = vmatpush1.bf16.msra.mxu0 0
    %643 = vmatprep.mubr.bf16.mxu0 0
    %644 = vmatmul.mubr.bf16.gmra.mrb[0].mxu0 %v609
    %v645 = vpop.f32.mrb[0].mxu0
    %v646 = vadd.f32 0.0, %v645
    %v647 = vpop.f32.mrb[0].mxu0
    %v648 = vpop.f32.mrb[0].mxu0
    %v649 = vadd.f32 0.0, %v648
    %v650 = vpop.f32.mrb[0].mxu0
    %651 = vdwg.mxu0
    %v652 = vadd.f32 %v389, %v646
    %v653 = vadd.f32 %v392, %v649
    %655 = vset.pattern.permute.xlu0 0
    %656 = vperm.xlu0 %655, %v295
    %v657 = vpop.permute.xlu0 %656
    %660 = vset.pattern.permute.xlu0 0
    %661 = vperm.xlu0 %660, %v296
    %v662 = vpop.permute.xlu0 %661
    %v664 = vadd.f32 %v652, %v657
    %v665 = vadd.f32 %v653, %v662
    %v666 = vsel %vm403, %v397, 0.0
    %v667 = vsel %vm403, %v400, 0.0
    %v668 = vadd.f32 %v666, %v667
    %v669 = vrot.slane %v668, 4
    %v670 = vadd.f32 %v668, %v669
    %v671 = vrot.slane %v670, 2
    %v672 = vadd.f32 %v670, %v671
    %v673 = vrot.slane %v672, 1
    %v674 = vadd.f32 %v672, %v673
    %v675 = vmul.f32 %v674, %v413
    %v676 = vsub.f32 %v397, %v675
    %v677 = vsub.f32 %v400, %v675
    %v678 = vmul.f32 %v676, %v676
    %v679 = vmul.f32 %v677, %v677
    %v680 = vsel %vm403, %v678, 0.0
    %v681 = vsel %vm403, %v679, 0.0
    %v682 = vadd.f32 %v680, %v681
    %v683 = vrot.slane %v682, 4
    %v684 = vadd.f32 %v682, %v683
    %v685 = vrot.slane %v684, 2
    %v686 = vadd.f32 %v684, %v685
    %v687 = vrot.slane %v686, 1
    %v688 = vadd.f32 %v686, %v687
    %v689 = vmul.f32 %v688, %v413
    %v690 = vadd.f32 %v689, 1e-05
    %v691 = vrsqrt.pop %v690
    %v692 = vmul.f32 %v676, %v691
    %v693 = vmul.f32 %v677, %v691
    %v694 = vmul.f32 %v692, %v436
    %v695 = vmul.f32 %v693, %v441
    %v696 = vadd.f32 %v694, %v448
    %v697 = vadd.f32 %v695, %v453
    %v698 = vpack.c.bf16 %v697, %v696
    %699 = vmatprep.subr.bf16.mxu0 0
    %700 = vmatpush1.bf16.msra.mxu0 %v698
    %701 = vmatprep.subr.bf16.mxu0 0
    %702 = vmatpush1.bf16.msra.mxu0 0
    %703 = vmatprep.subr.bf16.mxu0 0
    %704 = vmatpush1.bf16.msra.mxu0 0
    %705 = vmatprep.subr.bf16.mxu0 0
    %706 = vmatpush1.bf16.msra.mxu0 0
    %707 = vmatprep.subr.bf16.mxu0 0
    %708 = vmatpush1.bf16.msra.mxu0 0
    %709 = vmatprep.subr.bf16.mxu0 0
    %710 = vmatpush1.bf16.msra.mxu0 0
    %711 = vmatprep.subr.bf16.mxu0 0
    %712 = vmatpush1.bf16.msra.mxu0 0
    %713 = vmatprep.subr.bf16.mxu0 0
    %714 = vmatpush1.bf16.msra.mxu0 0
    %715 = vmatprep.subr.bf16.mxu0 0
    %716 = vmatpush1.bf16.msra.mxu0 0
    %717 = vmatprep.subr.bf16.mxu0 0
    %718 = vmatpush1.bf16.msra.mxu0 0
    %719 = vmatprep.subr.bf16.mxu0 0
    %720 = vmatpush1.bf16.msra.mxu0 0
    %721 = vmatprep.subr.bf16.mxu0 0
    %722 = vmatpush1.bf16.msra.mxu0 0
    %723 = vmatprep.subr.bf16.mxu0 0
    %724 = vmatpush1.bf16.msra.mxu0 0
    %725 = vmatprep.subr.bf16.mxu0 0
    %726 = vmatpush1.bf16.msra.mxu0 0
    %727 = vmatprep.subr.bf16.mxu0 0
    %728 = vmatpush1.bf16.msra.mxu0 0
    %729 = vmatprep.subr.bf16.mxu0 0
    %730 = vmatpush1.bf16.msra.mxu0 0
    %731 = vmatprep.mubr.bf16.mxu0 0
    %732 = vmatmul.mubr.bf16.gmra.mrb[0].mxu0 %v502
    %v733 = vpop.f32.mrb[0].mxu0
    %v734 = vadd.f32 %v461, %v733
    %v735 = vpop.f32.mrb[0].mxu0
    %v736 = vpop.f32.mrb[0].mxu0
    %v737 = vadd.f32 %v466, %v736
    %v738 = vpop.f32.mrb[0].mxu0
    %739 = vmatprep.mubr.bf16.mxu0 0
    %740 = vmatmul.mubr.bf16.gmra.mrb[0].mxu0 %v505
    %v741 = vpop.f32.mrb[0].mxu0
    %v742 = vadd.f32 %v471, %v741
    %v743 = vpop.f32.mrb[0].mxu0
    %v744 = vpop.f32.mrb[0].mxu0
    %v745 = vadd.f32 %v476, %v744
    %v746 = vpop.f32.mrb[0].mxu0
    %747 = vdwg.mxu0
    %v748 = vmul.f32 %v734, 0.5
    %v749 = vmul.f32 %v737, 0.5
    %v750 = vmul.f32 %v742, 0.5
    %v751 = vmul.f32 %v745, 0.5
    %v752 = vmul.f32 %v734, %v560
    %v753 = vmul.f32 %v737, %v560
    %v754 = vmul.f32 %v742, %v560
    %v755 = vmul.f32 %v745, %v560
    %v756 = verf.f32.pop %v752
    %v757 = verf.f32.pop %v753
    %v758 = verf.f32.pop %v754
    %v759 = verf.f32.pop %v755
    %v760 = vadd.f32 %v756, 1.0
    %v761 = vadd.f32 %v757, 1.0
    %v762 = vadd.f32 %v758, 1.0
    %v763 = vadd.f32 %v759, 1.0
    %v764 = vmul.f32 %v748, %v760
    %v765 = vmul.f32 %v749, %v761
    %v766 = vmul.f32 %v750, %v762
    %v767 = vmul.f32 %v751, %v763
    %v768 = vpack.c.bf16 %v765, %v764
    %v769 = vpack.c.bf16 %v767, %v766
    %770 = vmatprep.subr.bf16.mxu0 0
    %771 = vmatpush1.bf16.msra.mxu0 %v768
    %772 = vmatprep.subr.bf16.mxu0 0
    %773 = vmatpush1.bf16.msra.mxu0 %v769
    %774 = vmatprep.subr.bf16.mxu0 0
    %775 = vmatpush1.bf16.msra.mxu0 0
    %776 = vmatprep.subr.bf16.mxu0 0
    %777 = vmatpush1.bf16.msra.mxu0 0
    %778 = vmatprep.subr.bf16.mxu0 0
    %779 = vmatpush1.bf16.msra.mxu0 0
    %780 = vmatprep.subr.bf16.mxu0 0
    %781 = vmatpush1.bf16.msra.mxu0 0
    %782 = vmatprep.subr.bf16.mxu0 0
    %783 = vmatpush1.bf16.msra.mxu0 0
    %784 = vmatprep.subr.bf16.mxu0 0
    %785 = vmatpush1.bf16.msra.mxu0 0
    %786 = vmatprep.subr.bf16.mxu0 0
    %787 = vmatpush1.bf16.msra.mxu0 0
    %788 = vmatprep.subr.bf16.mxu0 0
    %789 = vmatpush1.bf16.msra.mxu0 0
    %790 = vmatprep.subr.bf16.mxu0 0
    %791 = vmatpush1.bf16.msra.mxu0 0
    %792 = vmatprep.subr.bf16.mxu0 0
    %793 = vmatpush1.bf16.msra.mxu0 0
    %794 = vmatprep.subr.bf16.mxu0 0
    %795 = vmatpush1.bf16.msra.mxu0 0
    %796 = vmatprep.subr.bf16.mxu0 0
    %797 = vmatpush1.bf16.msra.mxu0 0
    %798 = vmatprep.subr.bf16.mxu0 0
    %799 = vmatpush1.bf16.msra.mxu0 0
    %800 = vmatprep.subr.bf16.mxu0 0
    %801 = vmatpush1.bf16.msra.mxu0 0
    %802 = vmatprep.mubr.bf16.mxu0 0
    %803 = vmatmul.mubr.bf16.gmra.mrb[0].mxu0 %v609
    %v804 = vpop.f32.mrb[0].mxu0
    %v805 = vadd.f32 0.0, %v804
    %v806 = vpop.f32.mrb[0].mxu0
    %v807 = vpop.f32.mrb[0].mxu0
    %v808 = vadd.f32 0.0, %v807
    %v809 = vpop.f32.mrb[0].mxu0
    %810 = vdwg.mxu0
    %v811 = vadd.f32 %v397, %v805
    %v812 = vadd.f32 %v400, %v808
    %v813 = vadd.f32 %v811, %v657
    %v814 = vadd.f32 %v812, %v662
    %v815 = vsel %vm403, %v664, 0.0
    %816 = vadd.xlane.f32.xlu0 %v815
    %v817 = vpop.xlane.xlu0 %816
    %v818 = vsel %vm403, %v665, 0.0
    %819 = vadd.xlane.f32.xlu0 %v818
    %v820 = vpop.xlane.xlu0 %819
    %v821 = vsel %vm403, %v813, 0.0
    %822 = vadd.xlane.f32.xlu0 %v821
    %v823 = vpop.xlane.xlu0 %822
    %v824 = vsel %vm403, %v814, 0.0
    %825 = vadd.xlane.f32.xlu0 %v824
    %v826 = vpop.xlane.xlu0 %825
    %v827 = vrcp.pop 8.0
    %v828 = vmul.f32 %v817, %v827
    %v829 = vmul.f32 %v820, %v827
    %v830 = vmul.f32 %v823, %v827
    %v831 = vmul.f32 %v826, %v827
    %v832 = vsub.f32 %v664, %v828
    %v833 = vsub.f32 %v665, %v829
    %v834 = vsub.f32 %v813, %v830
    %v835 = vsub.f32 %v814, %v831
    %v836 = vmul.f32 %v832, %v832
    %v837 = vmul.f32 %v833, %v833
    %v838 = vmul.f32 %v834, %v834
    %v839 = vmul.f32 %v835, %v835
    %v840 = vsel %vm403, %v836, 0.0
    %841 = vadd.xlane.f32.xlu0 %v840
    %v842 = vpop.xlane.xlu0 %841
    %v843 = vsel %vm403, %v837, 0.0
    %844 = vadd.xlane.f32.xlu0 %v843
    %v845 = vpop.xlane.xlu0 %844
    %v846 = vsel %vm403, %v838, 0.0
    %847 = vadd.xlane.f32.xlu0 %v846
    %v848 = vpop.xlane.xlu0 %847
    %v849 = vsel %vm403, %v839, 0.0
    %850 = vadd.xlane.f32.xlu0 %v849
    %v851 = vpop.xlane.xlu0 %850
    %v852 = vmul.f32 %v842, %v827
    %v853 = vmul.f32 %v845, %v827
    %v854 = vmul.f32 %v848, %v827
    %v855 = vmul.f32 %v851, %v827
    %v856 = vadd.f32 %v852, 1e-05
    %v857 = vadd.f32 %v853, 1e-05
    %v858 = vadd.f32 %v854, 1e-05
    %v859 = vadd.f32 %v855, 1e-05
    %v860 = vrsqrt.pop %v856
    %v861 = vrsqrt.pop %v857
    %v862 = vrsqrt.pop %v858
    %v863 = vrsqrt.pop %v859
    %v864 = vmul.f32 %v832, %v860
    %v865 = vmul.f32 %v833, %v861
    %v866 = vmul.f32 %v834, %v862
    %v867 = vmul.f32 %v835, %v863
    %v869 = vlaneseq
    %v870 = vshrl.u32 %v869, 7
    %v871 = vsub.s32 0, %v870
    %v872 = vrot.slane %v297, %v871
    %v874 = vmul.f32 %v864, %v872
    %v875 = vmul.f32 %v865, %v872
    %v876 = vmul.f32 %v866, %v872
    %v877 = vmul.f32 %v867, %v872
    %v879 = vlaneseq
    %v880 = vshrl.u32 %v879, 7
    %v881 = vsub.s32 0, %v880
    %v882 = vrot.slane %v298, %v881
    %v884 = vadd.f32 %v874, %v882
    %v885 = vadd.f32 %v875, %v882
    %v886 = vadd.f32 %v876, %v882
    %v887 = vadd.f32 %v877, %v882
    %v888 = vpack.c.bf16 %v885, %v884
    %v889 = vpack.c.bf16 %v887, %v886
    %v891 = vlaneseq
    %v892 = vshrl.u32 %v891, 7
    %v893 = vsub.s32 0, %v892
    %v894 = vrot.slane %v300, %v893
    %v897 = vsel %vm403, %v888, 0
    %v900 = vsel %vm403, %v889, 0
    %vm902 = vcmask 1043456
    %v904 = vsel %vm902, %v299, 0
    %906 = vmatprep.subr.bf16.mxu0 0
    %907 = vmatpush1.bf16.msra.mxu0 %v904
    %908 = vmatprep.subr.bf16.mxu0 0
    %909 = vmatpush1.bf16.msra.mxu0 0
    %910 = vmatprep.subr.bf16.mxu0 0
    %911 = vmatpush1.bf16.msra.mxu0 0
    %912 = vmatprep.subr.bf16.mxu0 0
    %913 = vmatpush1.bf16.msra.mxu0 0
    %914 = vmatprep.subr.bf16.mxu0 0
    %915 = vmatpush1.bf16.msra.mxu0 0
    %916 = vmatprep.subr.bf16.mxu0 0
    %917 = vmatpush1.bf16.msra.mxu0 0
    %918 = vmatprep.subr.bf16.mxu0 0
    %919 = vmatpush1.bf16.msra.mxu0 0
    %920 = vmatprep.subr.bf16.mxu0 0
    %921 = vmatpush1.bf16.msra.mxu0 0
    %922 = vmatprep.subr.bf16.mxu0 0
    %923 = vmatpush1.bf16.msra.mxu0 0
    %924 = vmatprep.subr.bf16.mxu0 0
    %925 = vmatpush1.bf16.msra.mxu0 0
    %926 = vmatprep.subr.bf16.mxu0 0
    %927 = vmatpush1.bf16.msra.mxu0 0
    %928 = vmatprep.subr.bf16.mxu0 0
    %929 = vmatpush1.bf16.msra.mxu0 0
    %930 = vmatprep.subr.bf16.mxu0 0
    %931 = vmatpush1.bf16.msra.mxu0 0
    %932 = vmatprep.subr.bf16.mxu0 0
    %933 = vmatpush1.bf16.msra.mxu0 0
    %934 = vmatprep.subr.bf16.mxu0 0
    %935 = vmatpush1.bf16.msra.mxu0 0
    %936 = vmatprep.subr.bf16.mxu0 0
    %937 = vmatpush1.bf16.msra.mxu0 0
    %938 = vmatprep.mubr.bf16.mxu0 0
    %939 = vmatmul.mubr.bf16.gmra.mrb[0].mxu0 %v897
    %v940 = vpop.f32.mrb[0].mxu0
    %v941 = vadd.f32 %v894, %v940
    %v942 = vpop.f32.mrb[0].mxu0
    %v943 = vpop.f32.mrb[0].mxu0
    %v944 = vadd.f32 %v894, %v943
    %v945 = vpop.f32.mrb[0].mxu0
    %946 = vmatprep.mubr.bf16.mxu0 0
    %947 = vmatmul.mubr.bf16.gmra.mrb[0].mxu0 %v900
    %v948 = vpop.f32.mrb[0].mxu0
    %v949 = vadd.f32 %v894, %v948
    %v950 = vpop.f32.mrb[0].mxu0
    %v951 = vpop.f32.mrb[0].mxu0
    %v952 = vadd.f32 %v894, %v951
    %v953 = vpop.f32.mrb[0].mxu0
    %954 = vdwg.mxu0
    %v955 = vmul.f32 %v941, 0.5
    %v956 = vmul.f32 %v944, 0.5
    %v957 = vmul.f32 %v949, 0.5
    %v958 = vmul.f32 %v952, 0.5
    %v959 = vmul.f32 %v941, %v560
    %v960 = vmul.f32 %v944, %v560
    %v961 = vmul.f32 %v949, %v560
    %v962 = vmul.f32 %v952, %v560
    %v963 = verf.f32.pop %v959
    %v964 = verf.f32.pop %v960
    %v965 = verf.f32.pop %v961
    %v966 = verf.f32.pop %v962
    %v967 = vadd.f32 %v963, 1.0
    %v968 = vadd.f32 %v964, 1.0
    %v969 = vadd.f32 %v965, 1.0
    %v970 = vadd.f32 %v966, 1.0
    %v971 = vmul.f32 %v955, %v967
    %v972 = vmul.f32 %v956, %v968
    %v973 = vmul.f32 %v957, %v969
    %v974 = vmul.f32 %v958, %v970
    %v975 = vpack.c.bf16 %v972, %v971
    %v976 = vpack.c.bf16 %v974, %v973
    %v981 = vunpack.c.l.b16 %v301
    %v982 = vunpack.c.l.b16 %v302
    %v983 = vunpack.c.l.b16 %v303
    %v984 = vunpack.c.l.b16 %v304
    %v985 = vpack.c.b16 %v982, %v981
    %v986 = vpack.c.b16 %v984, %v983
    %v990 = vsel %vm607, %v975, 0
    %v993 = vsel %vm607, %v976, 0
    %995 = vmatprep.subr.bf16.mxu0 0
    %996 = vmatpush1.bf16.msra.mxu0 %v985
    %997 = vmatprep.subr.bf16.mxu0 0
    %998 = vmatpush1.bf16.msra.mxu0 %v986
    %999 = vmatprep.subr.bf16.mxu0 0
    %1000 = vmatpush1.bf16.msra.mxu0 0
    %1001 = vmatprep.subr.bf16.mxu0 0
    %1002 = vmatpush1.bf16.msra.mxu0 0
    %1003 = vmatprep.subr.bf16.mxu0 0
    %1004 = vmatpush1.bf16.msra.mxu0 0
    %1005 = vmatprep.subr.bf16.mxu0 0
    %1006 = vmatpush1.bf16.msra.mxu0 0
    %1007 = vmatprep.subr.bf16.mxu0 0
    %1008 = vmatpush1.bf16.msra.mxu0 0
    %1009 = vmatprep.subr.bf16.mxu0 0
    %1010 = vmatpush1.bf16.msra.mxu0 0
    %1011 = vmatprep.subr.bf16.mxu0 0
    %1012 = vmatpush1.bf16.msra.mxu0 0
    %1013 = vmatprep.subr.bf16.mxu0 0
    %1014 = vmatpush1.bf16.msra.mxu0 0
    %1015 = vmatprep.subr.bf16.mxu0 0
    %1016 = vmatpush1.bf16.msra.mxu0 0
    %1017 = vmatprep.subr.bf16.mxu0 0
    %1018 = vmatpush1.bf16.msra.mxu0 0
    %1019 = vmatprep.subr.bf16.mxu0 0
    %1020 = vmatpush1.bf16.msra.mxu0 0
    %1021 = vmatprep.subr.bf16.mxu0 0
    %1022 = vmatpush1.bf16.msra.mxu0 0
    %1023 = vmatprep.subr.bf16.mxu0 0
    %1024 = vmatpush1.bf16.msra.mxu0 0
    %1025 = vmatprep.subr.bf16.mxu0 0
    %1026 = vmatpush1.bf16.msra.mxu0 0
    %1027 = vmatprep.mubr.bf16.mxu0 0
    %1028 = vmatmul.mubr.bf16.gmra.mrb[0].mxu0 %v990
    %v1029 = vpop.f32.mrb[0].mxu0
    %v1030 = vadd.f32 0.0, %v1029
    %v1031 = vpop.f32.mrb[0].mxu0
    %v1032 = vpop.f32.mrb[0].mxu0
    %v1033 = vadd.f32 0.0, %v1032
    %v1034 = vpop.f32.mrb[0].mxu0
    %1035 = vmatprep.mubr.bf16.mxu0 0
    %1036 = vmatmul.mubr.bf16.gmra.mrb[0].mxu0 %v993
    %v1037 = vpop.f32.mrb[0].mxu0
    %v1038 = vadd.f32 0.0, %v1037
    %v1039 = vpop.f32.mrb[0].mxu0
    %v1040 = vpop.f32.mrb[0].mxu0
    %v1041 = vadd.f32 0.0, %v1040
    %v1042 = vpop.f32.mrb[0].mxu0
    %1043 = vdwg.mxu0
    %v1044 = vadd.f32 %v664, %v1030
    %v1045 = vadd.f32 %v665, %v1033
    %v1046 = vadd.f32 %v813, %v1038
    %v1047 = vadd.f32 %v814, %v1041
    %v1049 = vlaneseq
    %v1050 = vshrl.u32 %v1049, 7
    %v1051 = vsub.s32 0, %v1050
    %v1052 = vrot.slane %v305, %v1051
    %v1054 = vadd.f32 %v1044, %v1052
    %v1055 = vadd.f32 %v1045, %v1052
    %v1056 = vadd.f32 %v1046, %v1052
    %v1057 = vadd.f32 %v1047, %v1052
    %v1058 = vsel %vm403, %v1054, 0.0
    %1059 = vadd.xlane.f32.xlu0 %v1058
    %v1060 = vpop.xlane.xlu0 %1059
    %v1061 = vsel %vm403, %v1055, 0.0
    %1062 = vadd.xlane.f32.xlu0 %v1061
    %v1063 = vpop.xlane.xlu0 %1062
    %v1064 = vsel %vm403, %v1056, 0.0
    %1065 = vadd.xlane.f32.xlu0 %v1064
    %v1066 = vpop.xlane.xlu0 %1065
    %v1067 = vsel %vm403, %v1057, 0.0
    %1068 = vadd.xlane.f32.xlu0 %v1067
    %v1069 = vpop.xlane.xlu0 %1068
    %v1070 = vmul.f32 %v1060, %v827
    %v1071 = vmul.f32 %v1063, %v827
    %v1072 = vmul.f32 %v1066, %v827
    %v1073 = vmul.f32 %v1069, %v827
    %v1074 = vpack.c.bf16 %v1071, %v1070
    %v1075 = vpack.c.bf16 %v1073, %v1072
    %v1077 = vlaneseq
    %v1078 = vshrl.u32 %v1077, 7
    %v1079 = vsub.s32 0, %v1078
    %v1080 = vrot.slane %v308, %v1079
    %v1084 = vunpack.c.l.b16 %v1074
    %v1085 = vunpack.c.h.b16 %v1074
    %v1086 = vunpack.c.l.b16 %v1075
    %v1087 = vunpack.c.h.b16 %v1075
    %v1088 = vlaneseq
    %v1089 = vand.u32 %v1088, 127
    %v1090 = vlaneseq
    %v1091 = vshrl.u32 %v1090, 7
    %v1092 = vsub.s32 %v1089, %v1091
    %v1093 = vrot.slane %v1084, %v1092
    %v1094 = vadd.s32 %v1089, 4294967288
    %v1095 = vlaneseq
    %v1096 = vshrl.u32 %v1095, 7
    %v1097 = vsub.s32 %v1094, %v1096
    %v1098 = vrot.slane %v1085, %v1097
    %vm1099 = vcmask 130112
    %v1100 = vsel %vm1099, %v1098, %v1093
    %v1101 = vlaneseq
    %v1102 = vshrl.u32 %v1101, 7
    %v1103 = vsub.s32 %v1089, %v1102
    %v1104 = vrot.slane %v1086, %v1103
    %v1105 = vlaneseq
    %v1106 = vshrl.u32 %v1105, 7
    %v1107 = vsub.s32 %v1094, %v1106
    %v1108 = vrot.slane %v1087, %v1107
    %v1109 = vsel %vm1099, %v1108, %v1104
    %vm1110 = vcmask 1041409
    %v1111 = vsel %vm1110, %v1109, %v1100
    %v1112 = vpack.c.b16 %v1111, %v1111
    %v1115 = vunpack.c.l.b16 %v306
    %v1116 = vunpack.c.l.b16 %v307
    %v1117 = vpack.c.b16 %v1116, %v1115
    %v1120 = vsel %vm500, %v1112, 0
    %1122 = vmatprep.subr.bf16.mxu0 0
    %1123 = vmatpush1.bf16.msra.mxu0 %v1117
    %1124 = vmatprep.subr.bf16.mxu0 0
    %1125 = vmatpush1.bf16.msra.mxu0 0
    %1126 = vmatprep.subr.bf16.mxu0 0
    %1127 = vmatpush1.bf16.msra.mxu0 0
    %1128 = vmatprep.subr.bf16.mxu0 0
    %1129 = vmatpush1.bf16.msra.mxu0 0
    %1130 = vmatprep.subr.bf16.mxu0 0
    %1131 = vmatpush1.bf16.msra.mxu0 0
    %1132 = vmatprep.subr.bf16.mxu0 0
    %1133 = vmatpush1.bf16.msra.mxu0 0
    %1134 = vmatprep.subr.bf16.mxu0 0
    %1135 = vmatpush1.bf16.msra.mxu0 0
    %1136 = vmatprep.subr.bf16.mxu0 0
    %1137 = vmatpush1.bf16.msra.mxu0 0
    %1138 = vmatprep.subr.bf16.mxu0 0
    %1139 = vmatpush1.bf16.msra.mxu0 0
    %1140 = vmatprep.subr.bf16.mxu0 0
    %1141 = vmatpush1.bf16.msra.mxu0 0
    %1142 = vmatprep.subr.bf16.mxu0 0
    %1143 = vmatpush1.bf16.msra.mxu0 0
    %1144 = vmatprep.subr.bf16.mxu0 0
    %1145 = vmatpush1.bf16.msra.mxu0 0
    %1146 = vmatprep.subr.bf16.mxu0 0
    %1147 = vmatpush1.bf16.msra.mxu0 0
    %1148 = vmatprep.subr.bf16.mxu0 0
    %1149 = vmatpush1.bf16.msra.mxu0 0
    %1150 = vmatprep.subr.bf16.mxu0 0
    %1151 = vmatpush1.bf16.msra.mxu0 0
    %1152 = vmatprep.subr.bf16.mxu0 0
    %1153 = vmatpush1.bf16.msra.mxu0 0
    %1154 = vmatprep.mubr.bf16.mxu0 0
    %1155 = vmatmul.mubr.bf16.gmra.mrb[0].mxu0 %v1120
    %v1156 = vpop.f32.mrb[0].mxu0
    %v1157 = vadd.f32 %v1080, %v1156
    %v1158 = vpop.f32.mrb[0].mxu0
    %v1159 = vpop.f32.mrb[0].mxu0
    %v1160 = vpop.f32.mrb[0].mxu0
    %1161 = vdwg.mxu0
    %vm1162 = vcmask 1041408
    %v1163 = vsel %vm1162, %v1157, -inf
    %1164 = vmax.xlane.f32.xlu0 %v1163
    %v1165 = vpop.xlane.xlu0 %1164
    %v1166 = vsub.f32 %v1157, %v1165
    %v1167 = vmul.f32 %v1166, 1.442695
    %v1168 = vpow.pop %v1167
    %v1169 = vsel %vm1162, %v1168, 0.0
    %1170 = vadd.xlane.f32.xlu0 %v1169
    %v1171 = vpop.xlane.xlu0 %1170
    %v1172 = vlog2.pop %v1171
    %v1173 = vmul.f32 %v1172, 0.6931472
    %v1174 = vadd.f32 %v1173, %v1165
    %v1175 = vsub.f32 %v1157, %v1174
    %1176 = vst [vmem:[#allocation29] sm:$0x3] %v1175
    // Predicated region
    $region138: #{tpu_custom_call.1} parent=1 // pred_check
      _
    $region139: #{tpu_custom_call.1} parent=1 // pred_check_branch
      %1178 = sbr.rel (0) target = $region141
    $region140: #{tpu_custom_call.1} parent=1 // pred_region
      %s1180 = ssub.s32 32, 32
      %1181 = vsyncadd [#allocation4], %s1180
      %s1183 = sshll.u32 [#allocation29], 4
      %s1184 = int_to_ptr.vmem [resolvable:$true] %s1183
      %1186 = dma.vmem_to_hbm [thread:$0]  %s1184, 32, %s17, [#allocation4]
    $region141: #{tpu_custom_call.1} parent=1 // pred_fallthru
      _
    // Predicated region
    $region142: #{tpu_custom_call.1} parent=1 // pred_check
      _
    $region143: #{tpu_custom_call.1} parent=1 // pred_check_branch
      %1188 = sbr.rel (0) target = $region145
    $region144: #{tpu_custom_call.1} parent=1 // pred_region
      %1189 = dma.done [#allocation4], 32
    $region145: #{tpu_custom_call.1} parent=1 // pred_fallthru
      _
    %1190 = vsyncpa [#allocation3], 1
    %1191 = vsyncpa [#allocation6], 1
    %1192 = vsyncpa [#allocation9], 1
    %1193 = vsyncpa [#allocation12], 1
    %1194 = vsyncpa [#allocation15], 1
    %1195 = vsyncpa [#allocation18], 1
    %1196 = vsyncpa [#allocation21], 1
    %1197 = vsyncpa [#allocation24], 1
    %1198 = vsyncpa [#allocation27], 1
    %1199 = vsyncpa [#allocation4], 1

</llo_original>
